<compile_context>
chip_gen: v5e
topology: v5e:2x2
jax: 0.10.0
libtpu: 0.0.40
codegen_flags: <defaults>
</compile_context>

<pallas_src>
import jax
import jax.numpy as jnp
from jax import lax
from jax.experimental import pallas as pl
from jax.experimental.pallas import tpu as pltpu


# ---------------------------------------------------------------------------
# Kernel
# ---------------------------------------------------------------------------
def _conv_residual_kernel(x_up_ref, x_mid_ref, x_dn_ref,
                          w1_ref, b1_ref, w2_ref, b2_ref, out_ref):
    """One (batch, H-row-tile) grid step.

    x_up_ref : (1, 1,  W, Cin)  picture row  i*TH - 1  (clamped at the border)
    x_mid_ref: (1, TH, W, Cin)  picture rows [i*TH, (i+1)*TH)
    x_dn_ref : (1, 1,  W, Cin)  picture row  (i+1)*TH  (clamped at the border)
    w1_ref   : (Cin, C)     bf16, BN1 scale folded in
    b1_ref   : (1, C)       f32  (conv1 bias + BN1 shift)
    w2_ref   : (9, C, Cin)  bf16, tap = kh*3 + kw, BN2 scale folded in
    b2_ref   : (1, Cin)     f32
    out_ref  : (1, TH, W, Cin)
    """
    _, TH, W, Cin = x_mid_ref.shape
    C = w1_ref.shape[1]

    # Haloed input rows [i*TH - 1, (i+1)*TH + 1), built directly in bf16 since
    # it is only ever used as the conv1 MXU LHS (residual reads x_mid_ref).
    xh = jnp.concatenate([x_up_ref[0].astype(jnp.bfloat16),
                          x_mid_ref[0].astype(jnp.bfloat16),
                          x_dn_ref[0].astype(jnp.bfloat16)], axis=0)

    # ---- conv 1x1 (+ folded BN1 scale) + shift + LeakyReLU -------------------
    lhs1 = xh.reshape((TH + 2) * W, Cin)
    y1 = jnp.dot(lhs1, w1_ref[...], preferred_element_type=jnp.float32)
    y1 = y1 + b1_ref[...]
    y1 = jnp.maximum(y1, 0.1 * y1)                       # LeakyReLU(0.1)
    y1 = y1.reshape(TH + 2, W, C)

    # Zero the halo rows lying outside the picture (top of tile 0 / bottom of
    # the last tile): conv2 must see zero padding there, not leaky(b1).
    ri = lax.broadcasted_iota(jnp.int32, (TH + 2, 1, 1), 0)
    is_top = pl.program_id(1) == 0
    is_bot = pl.program_id(1) == pl.num_programs(1) - 1
    halo_oob = (is_top & (ri == 0)) | (is_bot & (ri == TH + 1))
    y1 = jnp.where(halo_oob, 0.0, y1)

    # bf16 copy of y1, zero-padded by one column on each side (W-axis zero
    # padding of the 3x3 conv).  H padding already exists via the halo rows.
    zcol = jnp.zeros((TH + 2, 1, C), jnp.bfloat16)
    y1p = jnp.concatenate([zcol, y1.astype(jnp.bfloat16), zcol], axis=1)

    # ---- conv 3x3: 9 accumulating per-tap matmuls (no im2col operand). ------
    acc = jnp.zeros((TH * W, Cin), jnp.float32)
    for kh in range(3):
        for kw in range(3):
            lhs = y1p[kh:kh + TH, kw:kw + W, :].reshape(TH * W, C)
            acc = acc + jnp.dot(lhs, w2_ref[kh * 3 + kw],
                                preferred_element_type=jnp.float32)
    y2 = acc + b2_ref[...]
    y2 = jnp.maximum(y2, 0.1 * y2).reshape(TH, W, Cin)

    # ---- residual add in f32 (reads the original f32 input block) -----------
    out_ref[...] = (x_mid_ref[...] + y2[None]).astype(out_ref.dtype)


# ---------------------------------------------------------------------------
# VMEM budgeting / tile sizing
# ---------------------------------------------------------------------------
def _vmem_capacity_bytes():
    try:
        info = pltpu.get_tpu_info()
        return int(getattr(info, "vmem_capacity_bytes", 64 << 20))
    except Exception:
        return 64 << 20          # conservative (v7x per-TC physical VMEM)


def _default_tile_budget():
    cap = _vmem_capacity_bytes()
    # v5e/v6e (128 MiB physical) can afford bigger live tiles than v7x (64 MiB).
    return 48 << 20 if cap >= (100 << 20) else 24 << 20


def _tile_vmem_bytes(tile_h, W, c_in, c_mid):
    """Rough per-step VMEM footprint (bytes), used only for tile sizing."""
    th = tile_h
    x_in = (th + 2) * W * c_in * 4            # mid + 2 halo input blocks (f32)
    out = th * W * c_in * 4                   # output block (f32)
    weights = (c_in * c_mid + 9 * c_mid * c_in) * 2 + (c_mid + c_in) * 4
    xh = (th + 2) * W * c_in * 2              # bf16 conv1 LHS
    y1 = (th + 2) * W * c_mid * 4             # f32 y1
    y1p = (th + 2) * (W + 2) * c_mid * 2      # bf16 padded copy
    tap = th * W * c_mid * 2                  # one per-tap LHS slice at a time
    acc = th * W * c_in * 4                   # f32 accumulator
    # input/output/weight blocks are double-buffered by the pipeline.
    return 2 * (x_in + out + weights) + xh + y1 + y1p + tap + acc


def _pick_tile_h(H, W, c_in, c_mid, budget_bytes):
    divisors = [d for d in range(H, 0, -1) if H % d == 0]
    for d in divisors:
        if _tile_vmem_bytes(d, W, c_in, c_mid) <= budget_bytes:
            return d
    return divisors[-1]


# ---------------------------------------------------------------------------
# Wrapper
# ---------------------------------------------------------------------------
def conv_residual(x_nhwc, params, *, tile_h=None, tile_budget_bytes=None):
    """DarkNet53 ConvResidual forward.  x_nhwc: (N, H, W, Cin) float32, NHWC."""
    N, H, W, Cin = x_nhwc.shape
    C = params['w1'].shape[1]
    assert params['w1'].shape == (Cin, C)
    assert params['w2'].shape == (9, C, Cin)

    if tile_budget_bytes is None:
        tile_budget_bytes = _default_tile_budget()
    if tile_h is None:
        tile_h = _pick_tile_h(H, W, Cin, C, tile_budget_bytes)
    assert H % tile_h == 0, "tile_h must divide H"
    th = tile_h
    n_row_tiles = H // th
    # NOTE: on v7x prefer N * n_row_tiles even so both TensorCores stay busy.

    est = _tile_vmem_bytes(th, W, Cin, C)           # already double-buffered
    vmem_limit = int(min(int(_vmem_capacity_bytes() * 0.75),
                         max(16 << 20, est + (8 << 20))))

    return pl.pallas_call(
        _conv_residual_kernel,
        out_shape=jax.ShapeDtypeStruct((N, H, W, Cin), x_nhwc.dtype),
        grid=(N, n_row_tiles),
        in_specs=[
            # 1-row halo above / TH own rows / 1-row halo below: three windows
            # of the same array (border rows clamped; masked in the kernel).
            pl.BlockSpec((1, 1, W, Cin),
                         lambda n, i: (n, jnp.maximum(i * th - 1, 0), 0, 0)),
            pl.BlockSpec((1, th, W, Cin), lambda n, i: (n, i, 0, 0)),
            pl.BlockSpec((1, 1, W, Cin),
                         lambda n, i: (n, jnp.minimum((i + 1) * th, H - 1), 0, 0)),
            # Weights / shifts: whole (small) arrays, constant index_map so the
            # pipeline only fetches them once.
            pl.BlockSpec((Cin, C), lambda n, i: (0, 0)),
            pl.BlockSpec((1, C), lambda n, i: (0, 0)),
            pl.BlockSpec((9, C, Cin), lambda n, i: (0, 0, 0)),
            pl.BlockSpec((1, Cin), lambda n, i: (0, 0)),
        ],
        out_specs=pl.BlockSpec((1, th, W, Cin), lambda n, i: (n, i, 0, 0)),
        compiler_params=pltpu.CompilerParams(
            # Both grid axes are independent -> v7x megacore can split them.
            dimension_semantics=("parallel", "parallel"),
            vmem_limit_bytes=vmem_limit),
    )(x_nhwc, x_nhwc, x_nhwc,
      params['w1'], params['b1'], params['w2'], params['b2'])


# ---------------------------------------------------------------------------
# Parameters (deterministic, synthetic) + BN folding
# ---------------------------------------------------------------------------
def make_params(key, c_in):
    c = c_in // 2
    eps = 1e-5
    ks = jax.random.split(key, 12)
    raw = dict(
        w1=jax.random.normal(ks[0], (c, c_in, 1, 1), jnp.float32) * 0.3,   # OIHW
        b1=jax.random.normal(ks[1], (c,), jnp.float32) * 0.1,
        g1=1.0 + 0.1 * jax.random.normal(ks[2], (c,), jnp.float32),
        be1=0.1 * jax.random.normal(ks[3], (c,), jnp.float32),
        m1=0.1 * jax.random.normal(ks[4], (c,), jnp.float32),
        v1=jax.random.uniform(ks[5], (c,), jnp.float32, 0.5, 1.5),
        w2=jax.random.normal(ks[6], (c_in, c, 3, 3), jnp.float32) * 0.3,   # OIHW
        b2=jax.random.normal(ks[7], (c_in,), jnp.float32) * 0.1,
        g2=1.0 + 0.1 * jax.random.normal(ks[8], (c_in,), jnp.float32),
        be2=0.1 * jax.random.normal(ks[9], (c_in,), jnp.float32),
        m2=0.1 * jax.random.normal(ks[10], (c_in,), jnp.float32),
        v2=jax.random.uniform(ks[11], (c_in,), jnp.float32, 0.5, 1.5),
    )
    # Fold BN (eval mode) into the convs: the scale goes into the weights (no
    # per-channel multiply in the kernel); conv bias + BN shift become one add.
    # TODO(synk): training-mode BatchNorm (running-stat updates) is not covered.
    s1 = raw['g1'] / jnp.sqrt(raw['v1'] + eps)
    sh1 = (raw['b1'] - raw['m1']) * s1 + raw['be1']
    s2 = raw['g2'] / jnp.sqrt(raw['v2'] + eps)
    sh2 = (raw['b2'] - raw['m2']) * s2 + raw['be2']

    w1_eff = raw['w1'][:, :, 0, 0] * s1[:, None]                  # (C, Cin)
    w2_eff = raw['w2'] * s2[:, None, None, None]                  # (Cin, C, 3, 3)
    # (kh, kw, c_in_of_conv2, c_out) -> tap-major (9, C, Cin), tap = kh*3 + kw.
    w2_packed = jnp.transpose(w2_eff, (2, 3, 1, 0)).reshape(9, c, c_in)

    kernel_params = dict(
        w1=jnp.transpose(w1_eff, (1, 0)).astype(jnp.bfloat16),    # (Cin, C)
        b1=sh1.reshape(1, c).astype(jnp.float32),
        w2=w2_packed.astype(jnp.bfloat16),                        # (9, C, Cin)
        b2=sh2.reshape(1, c_in).astype(jnp.float32),
    )
    return raw, kernel_params


# ---------------------------------------------------------------------------
# References
# ---------------------------------------------------------------------------
def reference_pytorch(x_nchw, raw):
    """Pure-JAX NCHW mirror of the PyTorch ConvResidual module (f32, eval BN)."""
    eps = 1e-5

    def conv_bn_act(h, w, b, g, be, m, v, pad):
        y = lax.conv_general_dilated(h, w, (1, 1), [(pad, pad), (pad, pad)],
                                     dimension_numbers=('NCHW', 'OIHW', 'NCHW'))
        y = y + b[None, :, None, None]
        y = (y - m[None, :, None, None]) / jnp.sqrt(v[None, :, None, None] + eps)
        y = y * g[None, :, None, None] + be[None, :, None, None]
        return jnp.where(y > 0, y, 0.1 * y)

    h = conv_bn_act(x_nchw, raw['w1'], raw['b1'], raw['g1'], raw['be1'],
                    raw['m1'], raw['v1'], 0)
    h = conv_bn_act(h, raw['w2'], raw['b2'], raw['g2'], raw['be2'],
                    raw['m2'], raw['v2'], 1)
    return x_nchw + h


def reference_matched(x_nhwc, kp):
    """NHWC mirror of the kernel's exact math (bf16 MXU operands, f32 accum)."""
    N, H, W, Cin = x_nhwc.shape
    C = kp['w1'].shape[1]
    y1 = jnp.einsum('nhwc,cd->nhwd', x_nhwc.astype(jnp.bfloat16), kp['w1'],
                    preferred_element_type=jnp.float32) + kp['b1']
    y1 = jnp.maximum(y1, 0.1 * y1)
    y1p = jnp.pad(y1.astype(jnp.bfloat16), ((0, 0), (1, 1), (1, 1), (0, 0)))
    w2 = kp['w2'].reshape(3, 3, C, Cin)
    acc = jnp.zeros((N, H, W, Cin), jnp.float32)
    for kh in range(3):
        for kw in range(3):
            acc = acc + jnp.einsum('nhwc,cd->nhwd',
                                   y1p[:, kh:kh + H, kw:kw + W, :], w2[kh, kw],
                                   preferred_element_type=jnp.float32)
    y2 = acc + kp['b2']
    y2 = jnp.maximum(y2, 0.1 * y2)
    return x_nhwc + y2


# ---------------------------------------------------------------------------
if __name__ == "__main__":
    key = jax.random.PRNGKey(0)
    k_x, k_p = jax.random.split(key)

    N, C_IN, H, W = 2, 4, 16, 16
    # The kernel path is NHWC end-to-end (channels on the lane axis).  The
    # NCHW transpose further below is test-harness only, to feed the PyTorch-
    # layout reference; a real NHWC pipeline never transposes.
    x_nhwc = jax.random.normal(k_x, (N, H, W, C_IN), jnp.float32)

    raw, params = make_params(k_p, C_IN)

    out = conv_residual(x_nhwc, params, tile_h=8)     # grid (N, H/8) = (2, 2)
    out = jax.block_until_ready(out)
    assert out.shape == x_nhwc.shape and out.dtype == x_nhwc.dtype

    # Strict check: pure-JAX mirror of the kernel's math (same bf16 operands).
    ref_m = jax.block_until_ready(reference_matched(x_nhwc, params))
    err_m = float(jnp.max(jnp.abs(out - ref_m)))
    assert err_m < 1e-3, f"kernel vs matched reference: max abs err {err_m}"

    # Semantic check: f32 reference mirroring the PyTorch module exactly; the
    # tolerance covers the bf16 MXU operands used inside the kernel.
    x_nchw = jnp.transpose(x_nhwc, (0, 3, 1, 2))
    ref = jnp.transpose(reference_pytorch(x_nchw, raw), (0, 2, 3, 1))
    ref = jax.block_until_ready(ref)
    err = float(jnp.max(jnp.abs(out - ref)))
    assert err < 1e-1, f"kernel vs f32 module reference: max abs err {err}"

    print("KERNEL_OK")
</pallas_src>

<mosaic_0001>
module attributes {stable_mosaic.version = 11 : i64} {
  func.func @_conv_residual_kernel(%arg0: i32, %arg1: i32, %arg2: memref<1x1x16x4xf32, #tpu.memory_space<vmem>>, %arg3: memref<1x8x16x4xf32, #tpu.memory_space<vmem>>, %arg4: memref<1x1x16x4xf32, #tpu.memory_space<vmem>>, %arg5: memref<4x2xbf16, #tpu.memory_space<vmem>>, %arg6: memref<1x2xf32, #tpu.memory_space<vmem>>, %arg7: memref<9x2x4xbf16, #tpu.memory_space<vmem>>, %arg8: memref<1x4xf32, #tpu.memory_space<vmem>>, %arg9: memref<1x8x16x4xf32, #tpu.memory_space<vmem>>) attributes {dimension_semantics = [#tpu.dimension_semantics<parallel>, #tpu.dimension_semantics<parallel>], iteration_bounds = array<i64: 2, 2>, scalar_prefetch = 0 : i64, scratch_operands = 0 : i64, tpu.core_type = #tpu.core_type<tc>, window_params = [{transform_indices = @transform_0, window_bounds = array<i64: 1, 1, 16, 4>}, {transform_indices = @transform_1, window_bounds = array<i64: 1, 8, 16, 4>}, {transform_indices = @transform_2, window_bounds = array<i64: 1, 1, 16, 4>}, {pipeline_mode = #tpu.pipeline_mode<synchronous>, transform_indices = @transform_3, window_bounds = array<i64: 4, 2>}, {pipeline_mode = #tpu.pipeline_mode<synchronous>, transform_indices = @transform_4, window_bounds = array<i64: 1, 2>}, {pipeline_mode = #tpu.pipeline_mode<synchronous>, transform_indices = @transform_5, window_bounds = array<i64: 9, 2, 4>}, {pipeline_mode = #tpu.pipeline_mode<synchronous>, transform_indices = @transform_6, window_bounds = array<i64: 1, 4>}, {transform_indices = @transform_7, window_bounds = array<i64: 1, 8, 16, 4>}]} {
    %c0 = arith.constant 0 : index
    %c0_0 = arith.constant 0 : index
    %c0_1 = arith.constant 0 : index
    %c0_2 = arith.constant 0 : index
    %0 = vector.load %arg2[%c0, %c0_0, %c0_1, %c0_2] : memref<1x1x16x4xf32, #tpu.memory_space<vmem>>, vector<1x1x16x4xf32>
    %1 = vector.shape_cast %0 : vector<1x1x16x4xf32> to vector<1x16x4xf32>
    %2 = arith.truncf %1 : vector<1x16x4xf32> to vector<1x16x4xbf16>
    %c0_3 = arith.constant 0 : index
    %c0_4 = arith.constant 0 : index
    %c0_5 = arith.constant 0 : index
    %c0_6 = arith.constant 0 : index
    %3 = vector.load %arg3[%c0_3, %c0_4, %c0_5, %c0_6] : memref<1x8x16x4xf32, #tpu.memory_space<vmem>>, vector<1x8x16x4xf32>
    %4 = vector.shape_cast %3 : vector<1x8x16x4xf32> to vector<8x16x4xf32>
    %5 = arith.truncf %4 : vector<8x16x4xf32> to vector<8x16x4xbf16>
    %c0_7 = arith.constant 0 : index
    %c0_8 = arith.constant 0 : index
    %c0_9 = arith.constant 0 : index
    %c0_10 = arith.constant 0 : index
    %6 = vector.load %arg4[%c0_7, %c0_8, %c0_9, %c0_10] : memref<1x1x16x4xf32, #tpu.memory_space<vmem>>, vector<1x1x16x4xf32>
    %7 = vector.shape_cast %6 : vector<1x1x16x4xf32> to vector<1x16x4xf32>
    %8 = arith.truncf %7 : vector<1x16x4xf32> to vector<1x16x4xbf16>
    %9 = tpu.concatenate %2, %5, %8 in 0 : vector<1x16x4xbf16>, vector<8x16x4xbf16>, vector<1x16x4xbf16> -> vector<10x16x4xbf16>
    %10 = vector.shape_cast %9 : vector<10x16x4xbf16> to vector<160x4xbf16>
    %c0_11 = arith.constant 0 : index
    %c0_12 = arith.constant 0 : index
    %11 = vector.load %arg5[%c0_11, %c0_12] : memref<4x2xbf16, #tpu.memory_space<vmem>>, vector<4x2xbf16>
    %cst = arith.constant dense<0.000000e+00> : vector<160x2xf32>
    %12 = tpu.matmul %10, %11, %cst {dimension_numbers = #tpu.dot_dimension_numbers<[1], [0], [0], [1], [0, 0, 1, 1], [], []>} : vector<160x4xbf16>, vector<4x2xbf16>, vector<160x2xf32> -> vector<160x2xf32>
    %c0_13 = arith.constant 0 : index
    %c0_14 = arith.constant 0 : index
    %13 = vector.load %arg6[%c0_13, %c0_14] : memref<1x2xf32, #tpu.memory_space<vmem>>, vector<1x2xf32>
    %14 = vector.broadcast %13 : vector<1x2xf32> to vector<160x2xf32>
    %15 = arith.addf %12, %14 : vector<160x2xf32>
    %cst_15 = arith.constant 1.000000e-01 : f32
    %16 = vector.broadcast %cst_15 : f32 to vector<160x2xf32>
    %17 = arith.mulf %16, %15 : vector<160x2xf32>
    %18 = arith.maximumf %15, %17 : vector<160x2xf32>
    %19 = vector.shape_cast %18 : vector<160x2xf32> to vector<10x16x2xf32>
    %20 = tpu.iota {dimensions = array<i32: 0>} : vector<10x1x1xi32>
    %c0_i32 = arith.constant 0 : i32
    %21 = arith.cmpi eq, %arg1, %c0_i32 : i32
    %c1_i32 = arith.constant 1 : i32
    %22 = arith.cmpi eq, %arg1, %c1_i32 : i32
    %c0_i32_16 = arith.constant 0 : i32
    %23 = vector.broadcast %c0_i32_16 : i32 to vector<10x1x1xi32>
    %24 = arith.cmpi eq, %20, %23 : vector<10x1x1xi32>
    %25 = vector.broadcast %21 : i1 to vector<10x1x1xi1>
    %26 = arith.andi %25, %24 : vector<10x1x1xi1>
    %c9_i32 = arith.constant 9 : i32
    %27 = vector.broadcast %c9_i32 : i32 to vector<10x1x1xi32>
    %28 = arith.cmpi eq, %20, %27 : vector<10x1x1xi32>
    %29 = vector.broadcast %22 : i1 to vector<10x1x1xi1>
    %30 = arith.andi %29, %28 : vector<10x1x1xi1>
    %31 = arith.ori %26, %30 : vector<10x1x1xi1>
    %cst_17 = arith.constant 0.000000e+00 : f32
    %32 = vector.shape_cast %31 : vector<10x1x1xi1> to vector<10x1x1xi1>
    %33 = vector.broadcast %32 : vector<10x1x1xi1> to vector<10x16x2xi1>
    %34 = vector.broadcast %cst_17 : f32 to vector<10x16x2xf32>
    %35 = arith.select %33, %34, %19 : vector<10x16x2xi1>, vector<10x16x2xf32>
    %cst_18 = arith.constant 0.000000e+00 : bf16
    %36 = vector.broadcast %cst_18 : bf16 to vector<10x1x2xbf16>
    %37 = arith.truncf %35 : vector<10x16x2xf32> to vector<10x16x2xbf16>
    %38 = tpu.concatenate %36, %37, %36 in 1 : vector<10x1x2xbf16>, vector<10x16x2xbf16>, vector<10x1x2xbf16> -> vector<10x18x2xbf16>
    %cst_19 = arith.constant 0.000000e+00 : f32
    %39 = vector.broadcast %cst_19 : f32 to vector<128x4xf32>
    %40 = vector.extract_strided_slice %38 {offsets = [0, 0, 0], sizes = [8, 16, 2], strides = [1, 1, 1]} : vector<10x18x2xbf16> to vector<8x16x2xbf16>
    %41 = vector.shape_cast %40 : vector<8x16x2xbf16> to vector<128x2xbf16>
    %c0_20 = arith.constant 0 : index
    %c0_21 = arith.constant 0 : index
    %c0_22 = arith.constant 0 : index
    %42 = vector.load %arg7[%c0_20, %c0_21, %c0_22] : memref<9x2x4xbf16, #tpu.memory_space<vmem>>, vector<1x2x4xbf16>
    %43 = vector.shape_cast %42 : vector<1x2x4xbf16> to vector<2x4xbf16>
    %cst_23 = arith.constant dense<0.000000e+00> : vector<128x4xf32>
    %44 = tpu.matmul %41, %43, %cst_23 {dimension_numbers = #tpu.dot_dimension_numbers<[1], [0], [0], [1], [0, 0, 1, 1], [], []>} : vector<128x2xbf16>, vector<2x4xbf16>, vector<128x4xf32> -> vector<128x4xf32>
    %45 = arith.addf %39, %44 : vector<128x4xf32>
    %46 = vector.extract_strided_slice %38 {offsets = [0, 1, 0], sizes = [8, 16, 2], strides = [1, 1, 1]} : vector<10x18x2xbf16> to vector<8x16x2xbf16>
    %47 = vector.shape_cast %46 : vector<8x16x2xbf16> to vector<128x2xbf16>
    %c1 = arith.constant 1 : index
    %c0_24 = arith.constant 0 : index
    %c0_25 = arith.constant 0 : index
    %48 = vector.load %arg7[%c1, %c0_24, %c0_25] : memref<9x2x4xbf16, #tpu.memory_space<vmem>>, vector<1x2x4xbf16>
    %49 = vector.shape_cast %48 : vector<1x2x4xbf16> to vector<2x4xbf16>
    %cst_26 = arith.constant dense<0.000000e+00> : vector<128x4xf32>
    %50 = tpu.matmul %47, %49, %cst_26 {dimension_numbers = #tpu.dot_dimension_numbers<[1], [0], [0], [1], [0, 0, 1, 1], [], []>} : vector<128x2xbf16>, vector<2x4xbf16>, vector<128x4xf32> -> vector<128x4xf32>
    %51 = arith.addf %45, %50 : vector<128x4xf32>
    %52 = vector.extract_strided_slice %38 {offsets = [0, 2, 0], sizes = [8, 16, 2], strides = [1, 1, 1]} : vector<10x18x2xbf16> to vector<8x16x2xbf16>
    %53 = vector.shape_cast %52 : vector<8x16x2xbf16> to vector<128x2xbf16>
    %c2 = arith.constant 2 : index
    %c0_27 = arith.constant 0 : index
    %c0_28 = arith.constant 0 : index
    %54 = vector.load %arg7[%c2, %c0_27, %c0_28] : memref<9x2x4xbf16, #tpu.memory_space<vmem>>, vector<1x2x4xbf16>
    %55 = vector.shape_cast %54 : vector<1x2x4xbf16> to vector<2x4xbf16>
    %cst_29 = arith.constant dense<0.000000e+00> : vector<128x4xf32>
    %56 = tpu.matmul %53, %55, %cst_29 {dimension_numbers = #tpu.dot_dimension_numbers<[1], [0], [0], [1], [0, 0, 1, 1], [], []>} : vector<128x2xbf16>, vector<2x4xbf16>, vector<128x4xf32> -> vector<128x4xf32>
    %57 = arith.addf %51, %56 : vector<128x4xf32>
    %58 = vector.extract_strided_slice %38 {offsets = [1, 0, 0], sizes = [8, 16, 2], strides = [1, 1, 1]} : vector<10x18x2xbf16> to vector<8x16x2xbf16>
    %59 = vector.shape_cast %58 : vector<8x16x2xbf16> to vector<128x2xbf16>
    %c3 = arith.constant 3 : index
    %c0_30 = arith.constant 0 : index
    %c0_31 = arith.constant 0 : index
    %60 = vector.load %arg7[%c3, %c0_30, %c0_31] : memref<9x2x4xbf16, #tpu.memory_space<vmem>>, vector<1x2x4xbf16>
    %61 = vector.shape_cast %60 : vector<1x2x4xbf16> to vector<2x4xbf16>
    %cst_32 = arith.constant dense<0.000000e+00> : vector<128x4xf32>
    %62 = tpu.matmul %59, %61, %cst_32 {dimension_numbers = #tpu.dot_dimension_numbers<[1], [0], [0], [1], [0, 0, 1, 1], [], []>} : vector<128x2xbf16>, vector<2x4xbf16>, vector<128x4xf32> -> vector<128x4xf32>
    %63 = arith.addf %57, %62 : vector<128x4xf32>
    %64 = vector.extract_strided_slice %38 {offsets = [1, 1, 0], sizes = [8, 16, 2], strides = [1, 1, 1]} : vector<10x18x2xbf16> to vector<8x16x2xbf16>
    %65 = vector.shape_cast %64 : vector<8x16x2xbf16> to vector<128x2xbf16>
    %c4 = arith.constant 4 : index
    %c0_33 = arith.constant 0 : index
    %c0_34 = arith.constant 0 : index
    %66 = vector.load %arg7[%c4, %c0_33, %c0_34] : memref<9x2x4xbf16, #tpu.memory_space<vmem>>, vector<1x2x4xbf16>
    %67 = vector.shape_cast %66 : vector<1x2x4xbf16> to vector<2x4xbf16>
    %cst_35 = arith.constant dense<0.000000e+00> : vector<128x4xf32>
    %68 = tpu.matmul %65, %67, %cst_35 {dimension_numbers = #tpu.dot_dimension_numbers<[1], [0], [0], [1], [0, 0, 1, 1], [], []>} : vector<128x2xbf16>, vector<2x4xbf16>, vector<128x4xf32> -> vector<128x4xf32>
    %69 = arith.addf %63, %68 : vector<128x4xf32>
    %70 = vector.extract_strided_slice %38 {offsets = [1, 2, 0], sizes = [8, 16, 2], strides = [1, 1, 1]} : vector<10x18x2xbf16> to vector<8x16x2xbf16>
    %71 = vector.shape_cast %70 : vector<8x16x2xbf16> to vector<128x2xbf16>
    %c5 = arith.constant 5 : index
    %c0_36 = arith.constant 0 : index
    %c0_37 = arith.constant 0 : index
    %72 = vector.load %arg7[%c5, %c0_36, %c0_37] : memref<9x2x4xbf16, #tpu.memory_space<vmem>>, vector<1x2x4xbf16>
    %73 = vector.shape_cast %72 : vector<1x2x4xbf16> to vector<2x4xbf16>
    %cst_38 = arith.constant dense<0.000000e+00> : vector<128x4xf32>
    %74 = tpu.matmul %71, %73, %cst_38 {dimension_numbers = #tpu.dot_dimension_numbers<[1], [0], [0], [1], [0, 0, 1, 1], [], []>} : vector<128x2xbf16>, vector<2x4xbf16>, vector<128x4xf32> -> vector<128x4xf32>
    %75 = arith.addf %69, %74 : vector<128x4xf32>
    %76 = vector.extract_strided_slice %38 {offsets = [2, 0, 0], sizes = [8, 16, 2], strides = [1, 1, 1]} : vector<10x18x2xbf16> to vector<8x16x2xbf16>
    %77 = vector.shape_cast %76 : vector<8x16x2xbf16> to vector<128x2xbf16>
    %c6 = arith.constant 6 : index
    %c0_39 = arith.constant 0 : index
    %c0_40 = arith.constant 0 : index
    %78 = vector.load %arg7[%c6, %c0_39, %c0_40] : memref<9x2x4xbf16, #tpu.memory_space<vmem>>, vector<1x2x4xbf16>
    %79 = vector.shape_cast %78 : vector<1x2x4xbf16> to vector<2x4xbf16>
    %cst_41 = arith.constant dense<0.000000e+00> : vector<128x4xf32>
    %80 = tpu.matmul %77, %79, %cst_41 {dimension_numbers = #tpu.dot_dimension_numbers<[1], [0], [0], [1], [0, 0, 1, 1], [], []>} : vector<128x2xbf16>, vector<2x4xbf16>, vector<128x4xf32> -> vector<128x4xf32>
    %81 = arith.addf %75, %80 : vector<128x4xf32>
    %82 = vector.extract_strided_slice %38 {offsets = [2, 1, 0], sizes = [8, 16, 2], strides = [1, 1, 1]} : vector<10x18x2xbf16> to vector<8x16x2xbf16>
    %83 = vector.shape_cast %82 : vector<8x16x2xbf16> to vector<128x2xbf16>
    %c7 = arith.constant 7 : index
    %c0_42 = arith.constant 0 : index
    %c0_43 = arith.constant 0 : index
    %84 = vector.load %arg7[%c7, %c0_42, %c0_43] : memref<9x2x4xbf16, #tpu.memory_space<vmem>>, vector<1x2x4xbf16>
    %85 = vector.shape_cast %84 : vector<1x2x4xbf16> to vector<2x4xbf16>
    %cst_44 = arith.constant dense<0.000000e+00> : vector<128x4xf32>
    %86 = tpu.matmul %83, %85, %cst_44 {dimension_numbers = #tpu.dot_dimension_numbers<[1], [0], [0], [1], [0, 0, 1, 1], [], []>} : vector<128x2xbf16>, vector<2x4xbf16>, vector<128x4xf32> -> vector<128x4xf32>
    %87 = arith.addf %81, %86 : vector<128x4xf32>
    %88 = vector.extract_strided_slice %38 {offsets = [2, 2, 0], sizes = [8, 16, 2], strides = [1, 1, 1]} : vector<10x18x2xbf16> to vector<8x16x2xbf16>
    %89 = vector.shape_cast %88 : vector<8x16x2xbf16> to vector<128x2xbf16>
    %c8 = arith.constant 8 : index
    %c0_45 = arith.constant 0 : index
    %c0_46 = arith.constant 0 : index
    %90 = vector.load %arg7[%c8, %c0_45, %c0_46] : memref<9x2x4xbf16, #tpu.memory_space<vmem>>, vector<1x2x4xbf16>
    %91 = vector.shape_cast %90 : vector<1x2x4xbf16> to vector<2x4xbf16>
    %cst_47 = arith.constant dense<0.000000e+00> : vector<128x4xf32>
    %92 = tpu.matmul %89, %91, %cst_47 {dimension_numbers = #tpu.dot_dimension_numbers<[1], [0], [0], [1], [0, 0, 1, 1], [], []>} : vector<128x2xbf16>, vector<2x4xbf16>, vector<128x4xf32> -> vector<128x4xf32>
    %93 = arith.addf %87, %92 : vector<128x4xf32>
    %c0_48 = arith.constant 0 : index
    %c0_49 = arith.constant 0 : index
    %94 = vector.load %arg8[%c0_48, %c0_49] : memref<1x4xf32, #tpu.memory_space<vmem>>, vector<1x4xf32>
    %95 = vector.broadcast %94 : vector<1x4xf32> to vector<128x4xf32>
    %96 = arith.addf %93, %95 : vector<128x4xf32>
    %cst_50 = arith.constant 1.000000e-01 : f32
    %97 = vector.broadcast %cst_50 : f32 to vector<128x4xf32>
    %98 = arith.mulf %97, %96 : vector<128x4xf32>
    %99 = arith.maximumf %96, %98 : vector<128x4xf32>
    %100 = vector.shape_cast %99 : vector<128x4xf32> to vector<8x16x4xf32>
    %c0_51 = arith.constant 0 : index
    %c0_52 = arith.constant 0 : index
    %c0_53 = arith.constant 0 : index
    %c0_54 = arith.constant 0 : index
    %101 = vector.load %arg3[%c0_51, %c0_52, %c0_53, %c0_54] : memref<1x8x16x4xf32, #tpu.memory_space<vmem>>, vector<1x8x16x4xf32>
    %102 = vector.shape_cast %100 : vector<8x16x4xf32> to vector<1x8x16x4xf32>
    %103 = arith.addf %101, %102 : vector<1x8x16x4xf32>
    %c0_55 = arith.constant 0 : index
    %c0_56 = arith.constant 0 : index
    %c0_57 = arith.constant 0 : index
    %c0_58 = arith.constant 0 : index
    %104 = vector.load %arg9[%c0_55, %c0_56, %c0_57, %c0_58] : memref<1x8x16x4xf32, #tpu.memory_space<vmem>>, vector<1x8x16x4xf32>
    tpu.vector_store %arg9[%c0_55, %c0_56, %c0_57, %c0_58], %103 {strides = array<i32>} : memref<1x8x16x4xf32, #tpu.memory_space<vmem>>, vector<1x8x16x4xf32>,
    return
  }
  func.func @transform_0(%arg0: i32, %arg1: i32) -> (i32, i32, i32, i32) {
    %c8_i32 = arith.constant 8 : i32
    %0 = arith.muli %arg1, %c8_i32 : i32
    %c1_i32 = arith.constant 1 : i32
    %1 = arith.subi %0, %c1_i32 : i32
    %c0_i32 = arith.constant 0 : i32
    %2 = arith.maxsi %1, %c0_i32 : i32
    %c0_i32_0 = arith.constant 0 : i32
    %c0_i32_1 = arith.constant 0 : i32
    %c0_i32_2 = arith.constant 0 : i32
    return %arg0, %2, %c0_i32_0, %c0_i32_1 : i32, i32, i32, i32
  }
  func.func @transform_1(%arg0: i32, %arg1: i32) -> (i32, i32, i32, i32) {
    %c0_i32 = arith.constant 0 : i32
    %c0_i32_0 = arith.constant 0 : i32
    %c0_i32_1 = arith.constant 0 : i32
    return %arg0, %arg1, %c0_i32, %c0_i32_0 : i32, i32, i32, i32
  }
  func.func @transform_2(%arg0: i32, %arg1: i32) -> (i32, i32, i32, i32) {
    %c1_i32 = arith.constant 1 : i32
    %0 = arith.addi %arg1, %c1_i32 : i32
    %c8_i32 = arith.constant 8 : i32
    %1 = arith.muli %0, %c8_i32 : i32
    %c15_i32 = arith.constant 15 : i32
    %2 = arith.minsi %1, %c15_i32 : i32
    %c0_i32 = arith.constant 0 : i32
    %c0_i32_0 = arith.constant 0 : i32
    %c0_i32_1 = arith.constant 0 : i32
    return %arg0, %2, %c0_i32, %c0_i32_0 : i32, i32, i32, i32
  }
  func.func @transform_3(%arg0: i32, %arg1: i32) -> (i32, i32) {
    %c0_i32 = arith.constant 0 : i32
    %c0_i32_0 = arith.constant 0 : i32
    %c0_i32_1 = arith.constant 0 : i32
    return %c0_i32, %c0_i32_0 : i32, i32
  }
  func.func @transform_4(%arg0: i32, %arg1: i32) -> (i32, i32) {
    %c0_i32 = arith.constant 0 : i32
    %c0_i32_0 = arith.constant 0 : i32
    %c0_i32_1 = arith.constant 0 : i32
    return %c0_i32, %c0_i32_0 : i32, i32
  }
  func.func @transform_5(%arg0: i32, %arg1: i32) -> (i32, i32, i32) {
    %c0_i32 = arith.constant 0 : i32
    %c0_i32_0 = arith.constant 0 : i32
    %c0_i32_1 = arith.constant 0 : i32
    %c0_i32_2 = arith.constant 0 : i32
    return %c0_i32, %c0_i32_0, %c0_i32_1 : i32, i32, i32
  }
  func.func @transform_6(%arg0: i32, %arg1: i32) -> (i32, i32) {
    %c0_i32 = arith.constant 0 : i32
    %c0_i32_0 = arith.constant 0 : i32
    %c0_i32_1 = arith.constant 0 : i32
    return %c0_i32, %c0_i32_0 : i32, i32
  }
  func.func @transform_7(%arg0: i32, %arg1: i32) -> (i32, i32, i32, i32) {
    %c0_i32 = arith.constant 0 : i32
    %c0_i32_0 = arith.constant 0 : i32
    %c0_i32_1 = arith.constant 0 : i32
    return %arg0, %arg1, %c0_i32, %c0_i32_0 : i32, i32, i32, i32
  }
}

</mosaic_0001>

<llo_original>
// kernel: tpu_custom_call.1
$region0: #{tpu_custom_call.1}
  #allocation0 [shape = 'u32[]', space=smem, size = 0x4, offset = 0x4, fixed_abs, tag = 'smem constant byte address 0x4 - core index']
  #allocation1 [shape = 'u32[72,128]{1,0:T(1,128)}', space=vmem, size = 0x9000, scoped, tag = 'internal scratch']
  %s0 = inlined_call_operand.vmem [shape: f32[2,16,16,4], index: 0, kind: input, shape index: {}]
  %s1 = inlined_call_operand.vmem [shape: f32[2,16,16,4], index: 1, kind: input, shape index: {}]
  %s2 = inlined_call_operand.vmem [shape: f32[2,16,16,4], index: 2, kind: input, shape index: {}]
  %s3 = inlined_call_operand.vmem [shape: bf16[4,2], index: 3, kind: input, shape index: {}]
  %s4 = inlined_call_operand.vmem [shape: f32[1,2], index: 4, kind: input, shape index: {}]
  %s5 = inlined_call_operand.vmem [shape: bf16[9,2,4], index: 5, kind: input, shape index: {}]
  %s6 = inlined_call_operand.vmem [shape: f32[1,4], index: 6, kind: input, shape index: {}]
  %s7 = inlined_call_operand.vmem [shape: f32[2,16,16,4], index: 7, kind: output, shape index: {}]
  %s8 = sld [smem:[#allocation0]]
  $region61: #{tpu_custom_call.1} parent=0
    _
  %s10 = ssub.s32 1, %s8
  %s11 = scalar_select 0, %s10, %s8
  loop: start=0, step=1, limit=6
  $region2: #{tpu_custom_call.1} parent=0 // loop_pre_header
    _
  $region3: #{tpu_custom_call.1} parent=0 // loop_header
    %s13 = sphi 0, %s17
    %p14 = scmp.ge.s32.totalorder %s13, 6
    %s20 = sphi 0, %s32
    %s21 = sphi 0, %s28
    %s22 = sphi 0, %s20
    %s23 = sphi 0, %s21
    %s24 = sphi 0, %s22
    %s25 = sphi 0, %s23
    %s45 = sphi 0, %s47
    %s48 = sphi 0, %s45
    %s49 = sphi 0, %s48
    %s65 = sphi 0, %s49
    %s73 = sphi 0, %s75
    %s76 = sphi 0, %s73
    %s77 = sphi 0, %s76
    %s93 = sphi 0, %s77
    %s109 = sphi 0, %s111
    %s112 = sphi 0, %s109
    %s113 = sphi 0, %s112
    %s129 = sphi 0, %s113
    %s133 = sphi 0, %s133
    %s135 = sphi 0, %s133
    %s136 = sphi 0, %s135
    %s150 = sphi 0, %s136
    %s154 = sphi 0, %s154
    %s156 = sphi 0, %s154
    %s157 = sphi 0, %s156
    %s171 = sphi 0, %s157
    %s175 = sphi 0, %s175
    %s177 = sphi 0, %s175
    %s178 = sphi 0, %s177
    %s192 = sphi 0, %s178
    %s196 = sphi 0, %s196
    %s198 = sphi 0, %s196
    %s199 = sphi 0, %s198
    %s213 = sphi 0, %s199
    %s221 = sphi 0, %s223
    %s224 = sphi 0, %s221
    %s225 = sphi 0, %s224
    %s241 = sphi 0, %s225
  $region4: #{tpu_custom_call.1} parent=0 // loop_header_branch
    %16 = sbr.rel (%p14) target = $region8
  $region5: #{tpu_custom_call.1} parent=0 // loop_body
    %s18 = ssub.s32 %s13, 1
    %s19 = ssub.s32 %s13, 2
    %s26 = sadd.s32 1, %s21
    %p27 = scmp.ge.s32.totalorder %s26, 2
    %s28 = scalar_select %p27, 0, %s26
    %s29 = sadd.s32 1, %s20
    %s30 = scalar_select %p27, %s29, %s20
    %p31 = scmp.ge.s32.totalorder %s30, 2
    %s32 = scalar_select %p31, 0, %s30
    %s33 = smul.u32 %s21, 8
    %s34 = ssub.s32 %s33, 1
    %p35 = scmp.gt.s32.totalorder %s34, 0
    %s36 = scalar_select %p35, %s34, 0
    %s37 = smul.u32 %s28, 8
    %s38 = ssub.s32 %s37, 1
    %p39 = scmp.gt.s32.totalorder %s38, 0
    %s40 = scalar_select %p39, %s38, 0
    %s41 = ssub.s32 %s20, %s32
    %s42 = ssub.s32 %s36, %s40
    %s43 = sor.u32 %s41, %s42
    %p44 = scmp.eq.s32.totalorder %s43, 0
    %s46 = sadd.s32 %s45, 1
    %s47 = scalar_select %p44, %s45, %s46
    %p50 = pneg %p44
    %p51 = scmp.eq.s32.totalorder %s13, 3
    %p52 = por %p50, %p51
    %p53 = scmp.ne.s32.totalorder %s45, %s48
    %p54 = scmp.eq.s32.totalorder %s13, 0
    %p55 = por %p53, %p54
    %p56 = scmp.ne.s32.totalorder %s45, %s48
    %p57 = scmp.eq.s32.totalorder %s18, 3
    %p58 = por %p56, %p57
    %p59 = scmp.ne.s32.totalorder %s48, %s49
    %p60 = scmp.eq.s32.totalorder %s18, 0
    %p61 = por %p59, %p60
    %p62 = scmp.ne.s32.totalorder %s48, %s49
    %p63 = scmp.eq.s32.totalorder %s19, 3
    %p64 = por %p62, %p63
    %p66 = scmp.ne.s32.totalorder %s49, %s65
    %p67 = scmp.eq.s32.totalorder %s19, 0
    %p68 = por %p66, %p67
    %s69 = ssub.s32 %s20, %s32
    %s70 = ssub.s32 %s21, %s28
    %s71 = sor.u32 %s69, %s70
    %p72 = scmp.eq.s32.totalorder %s71, 0
    %s74 = sadd.s32 %s73, 1
    %s75 = scalar_select %p72, %s73, %s74
    %p78 = pneg %p72
    %p79 = scmp.eq.s32.totalorder %s13, 3
    %p80 = por %p78, %p79
    %p81 = scmp.ne.s32.totalorder %s73, %s76
    %p82 = scmp.eq.s32.totalorder %s13, 0
    %p83 = por %p81, %p82
    %p84 = scmp.ne.s32.totalorder %s73, %s76
    %p85 = scmp.eq.s32.totalorder %s18, 3
    %p86 = por %p84, %p85
    %p87 = scmp.ne.s32.totalorder %s76, %s77
    %p88 = scmp.eq.s32.totalorder %s18, 0
    %p89 = por %p87, %p88
    %p90 = scmp.ne.s32.totalorder %s76, %s77
    %p91 = scmp.eq.s32.totalorder %s19, 3
    %p92 = por %p90, %p91
    %p94 = scmp.ne.s32.totalorder %s77, %s93
    %p95 = scmp.eq.s32.totalorder %s19, 0
    %p96 = por %p94, %p95
    %s97 = sadd.s32 %s21, 1
    %s98 = smul.u32 %s97, 8
    %p99 = scmp.lt.s32.totalorder %s98, 15
    %s100 = scalar_select %p99, %s98, 15
    %s101 = sadd.s32 %s28, 1
    %s102 = smul.u32 %s101, 8
    %p103 = scmp.lt.s32.totalorder %s102, 15
    %s104 = scalar_select %p103, %s102, 15
    %s105 = ssub.s32 %s20, %s32
    %s106 = ssub.s32 %s100, %s104
    %s107 = sor.u32 %s105, %s106
    %p108 = scmp.eq.s32.totalorder %s107, 0
    %s110 = sadd.s32 %s109, 1
    %s111 = scalar_select %p108, %s109, %s110
    %p114 = pneg %p108
    %p115 = scmp.eq.s32.totalorder %s13, 3
    %p116 = por %p114, %p115
    %p117 = scmp.ne.s32.totalorder %s109, %s112
    %p118 = scmp.eq.s32.totalorder %s13, 0
    %p119 = por %p117, %p118
    %p120 = scmp.ne.s32.totalorder %s109, %s112
    %p121 = scmp.eq.s32.totalorder %s18, 3
    %p122 = por %p120, %p121
    %p123 = scmp.ne.s32.totalorder %s112, %s113
    %p124 = scmp.eq.s32.totalorder %s18, 0
    %p125 = por %p123, %p124
    %p126 = scmp.ne.s32.totalorder %s112, %s113
    %p127 = scmp.eq.s32.totalorder %s19, 3
    %p128 = por %p126, %p127
    %p130 = scmp.ne.s32.totalorder %s113, %s129
    %p131 = scmp.eq.s32.totalorder %s19, 0
    %p132 = por %p130, %p131
    %s134 = sadd.s32 %s133, 1
    %p137 = scmp.eq.s32.totalorder %s13, 3
    %p138 = scmp.ne.s32.totalorder %s133, %s135
    %p139 = scmp.eq.s32.totalorder %s13, 0
    %p140 = por %p138, %p139
    %p141 = scmp.ne.s32.totalorder %s133, %s135
    %p142 = scmp.eq.s32.totalorder %s18, 3
    %p143 = por %p141, %p142
    %p144 = scmp.ne.s32.totalorder %s135, %s136
    %p145 = scmp.eq.s32.totalorder %s18, 0
    %p146 = por %p144, %p145
    %p147 = scmp.ne.s32.totalorder %s135, %s136
    %p148 = scmp.eq.s32.totalorder %s19, 3
    %p149 = por %p147, %p148
    %p151 = scmp.ne.s32.totalorder %s136, %s150
    %p152 = scmp.eq.s32.totalorder %s19, 0
    %p153 = por %p151, %p152
    %s155 = sadd.s32 %s154, 1
    %p158 = scmp.eq.s32.totalorder %s13, 3
    %p159 = scmp.ne.s32.totalorder %s154, %s156
    %p160 = scmp.eq.s32.totalorder %s13, 0
    %p161 = por %p159, %p160
    %p162 = scmp.ne.s32.totalorder %s154, %s156
    %p163 = scmp.eq.s32.totalorder %s18, 3
    %p164 = por %p162, %p163
    %p165 = scmp.ne.s32.totalorder %s156, %s157
    %p166 = scmp.eq.s32.totalorder %s18, 0
    %p167 = por %p165, %p166
    %p168 = scmp.ne.s32.totalorder %s156, %s157
    %p169 = scmp.eq.s32.totalorder %s19, 3
    %p170 = por %p168, %p169
    %p172 = scmp.ne.s32.totalorder %s157, %s171
    %p173 = scmp.eq.s32.totalorder %s19, 0
    %p174 = por %p172, %p173
    %s176 = sadd.s32 %s175, 1
    %p179 = scmp.eq.s32.totalorder %s13, 3
    %p180 = scmp.ne.s32.totalorder %s175, %s177
    %p181 = scmp.eq.s32.totalorder %s13, 0
    %p182 = por %p180, %p181
    %p183 = scmp.ne.s32.totalorder %s175, %s177
    %p184 = scmp.eq.s32.totalorder %s18, 3
    %p185 = por %p183, %p184
    %p186 = scmp.ne.s32.totalorder %s177, %s178
    %p187 = scmp.eq.s32.totalorder %s18, 0
    %p188 = por %p186, %p187
    %p189 = scmp.ne.s32.totalorder %s177, %s178
    %p190 = scmp.eq.s32.totalorder %s19, 3
    %p191 = por %p189, %p190
    %p193 = scmp.ne.s32.totalorder %s178, %s192
    %p194 = scmp.eq.s32.totalorder %s19, 0
    %p195 = por %p193, %p194
    %s197 = sadd.s32 %s196, 1
    %p200 = scmp.eq.s32.totalorder %s13, 3
    %p201 = scmp.ne.s32.totalorder %s196, %s198
    %p202 = scmp.eq.s32.totalorder %s13, 0
    %p203 = por %p201, %p202
    %p204 = scmp.ne.s32.totalorder %s196, %s198
    %p205 = scmp.eq.s32.totalorder %s18, 3
    %p206 = por %p204, %p205
    %p207 = scmp.ne.s32.totalorder %s198, %s199
    %p208 = scmp.eq.s32.totalorder %s18, 0
    %p209 = por %p207, %p208
    %p210 = scmp.ne.s32.totalorder %s198, %s199
    %p211 = scmp.eq.s32.totalorder %s19, 3
    %p212 = por %p210, %p211
    %p214 = scmp.ne.s32.totalorder %s199, %s213
    %p215 = scmp.eq.s32.totalorder %s19, 0
    %p216 = por %p214, %p215
    %s217 = ssub.s32 %s20, %s32
    %s218 = ssub.s32 %s21, %s28
    %s219 = sor.u32 %s217, %s218
    %p220 = scmp.eq.s32.totalorder %s219, 0
    %s222 = sadd.s32 %s221, 1
    %s223 = scalar_select %p220, %s221, %s222
    %p226 = pneg %p220
    %p227 = scmp.eq.s32.totalorder %s13, 3
    %p228 = por %p226, %p227
    %p229 = scmp.ne.s32.totalorder %s221, %s224
    %p230 = scmp.eq.s32.totalorder %s13, 0
    %p231 = por %p229, %p230
    %p232 = scmp.ne.s32.totalorder %s221, %s224
    %p233 = scmp.eq.s32.totalorder %s18, 3
    %p234 = por %p232, %p233
    %p235 = scmp.ne.s32.totalorder %s224, %s225
    %p236 = scmp.eq.s32.totalorder %s18, 0
    %p237 = por %p235, %p236
    %p238 = scmp.ne.s32.totalorder %s224, %s225
    %p239 = scmp.eq.s32.totalorder %s19, 3
    %p240 = por %p238, %p239
    %p242 = scmp.ne.s32.totalorder %s225, %s241
    %p243 = scmp.eq.s32.totalorder %s19, 0
    %p244 = por %p242, %p243
    %p245 = scmp.le.s32.totalorder 1, %s13
    %p246 = scmp.lt.s32.totalorder %s13, 5
    %p247 = pnand %p245, %p246
    %p248 = pneg %p247
    // Predicated region
    $region9: #{tpu_custom_call.1} parent=5 // pred_check
      _
    $region10: #{tpu_custom_call.1} parent=5 // pred_check_branch
      %250 = sbr.rel (%p247) target = $region12
    $region11: #{tpu_custom_call.1} parent=5 // pred_region
      %s251 = ssub.s32 %s13, 1
      // Predicated region
      $region13: #{tpu_custom_call.1} parent=11 // pred_check
        %p252 = pneg %p146
      $region14: #{tpu_custom_call.1} parent=11 // pred_check_branch
        %254 = sbr.rel (%p252) target = $region16
      $region15: #{tpu_custom_call.1} parent=11 // pred_region
        _
      $region16: #{tpu_custom_call.1} parent=11 // pred_fallthru
        _
      // Predicated region
      $region17: #{tpu_custom_call.1} parent=11 // pred_check
        %p255 = pneg %p167
      $region18: #{tpu_custom_call.1} parent=11 // pred_check_branch
        %257 = sbr.rel (%p255) target = $region20
      $region19: #{tpu_custom_call.1} parent=11 // pred_region
        _
      $region20: #{tpu_custom_call.1} parent=11 // pred_fallthru
        _
      // Predicated region
      $region21: #{tpu_custom_call.1} parent=11 // pred_check
        %p258 = pneg %p188
      $region22: #{tpu_custom_call.1} parent=11 // pred_check_branch
        %260 = sbr.rel (%p258) target = $region24
      $region23: #{tpu_custom_call.1} parent=11 // pred_region
        _
      $region24: #{tpu_custom_call.1} parent=11 // pred_fallthru
        _
      // Predicated region
      $region25: #{tpu_custom_call.1} parent=11 // pred_check
        %p261 = pneg %p209
      $region26: #{tpu_custom_call.1} parent=11 // pred_check_branch
        %263 = sbr.rel (%p261) target = $region28
      $region27: #{tpu_custom_call.1} parent=11 // pred_region
        _
      $region28: #{tpu_custom_call.1} parent=11 // pred_fallthru
        _
    $region12: #{tpu_custom_call.1} parent=5 // pred_fallthru
      _
    %p264 = scmp.lt.s32.totalorder %s13, 4
    // Predicated region
    $region29: #{tpu_custom_call.1} parent=5 // pred_check
      %p265 = pneg %p264
    $region30: #{tpu_custom_call.1} parent=5 // pred_check_branch
      %267 = sbr.rel (%p265) target = $region32
    $region31: #{tpu_custom_call.1} parent=5 // pred_region
      // Predicated region
      $region33: #{tpu_custom_call.1} parent=31 // pred_check
        %p268 = pneg %p55
      $region34: #{tpu_custom_call.1} parent=31 // pred_check_branch
        %270 = sbr.rel (%p268) target = $region36
      $region35: #{tpu_custom_call.1} parent=31 // pred_region
        %s271 = smul.u32 %s21, 8
        %s272 = ssub.s32 %s271, 1
        %p273 = scmp.gt.s32.totalorder %s272, 0
        %s274 = scalar_select %p273, %s272, 0
        %p275 = scmp.lt.s32.totalorder %s20, 1
        %s276 = scalar_select %p275, %s20, 1
        %p277 = scmp.lt.s32.totalorder %s274, 15
        %s278 = scalar_select %p277, %s274, 15
        %s279 = smul.addr %s278, 2
        %s280 = smul.addr %s276, 32
        %s281 = sadd.s32 %s279, %s280
        %s282 = smul.addr %s281, 8
        %s283 = scalar_lea.vmem %s0, %s282
        %s284 = smul.u32 %s21, 8
        %s285 = ssub.s32 %s284, 1
        %p286 = scmp.gt.s32.totalorder %s285, 0
        %s287 = scalar_select %p286, %s285, 0
      $region36: #{tpu_custom_call.1} parent=31 // pred_fallthru
        _
      // Predicated region
      $region37: #{tpu_custom_call.1} parent=31 // pred_check
        %p288 = pneg %p83
      $region38: #{tpu_custom_call.1} parent=31 // pred_check_branch
        %290 = sbr.rel (%p288) target = $region40
      $region39: #{tpu_custom_call.1} parent=31 // pred_region
        %s291 = smul.u32 8, %s21
        %p292 = scmp.lt.s32.totalorder %s20, 1
        %s293 = scalar_select %p292, %s20, 1
        %p294 = scmp.lt.s32.totalorder %s291, 15
        %s295 = scalar_select %p294, %s291, 15
        %s296 = smul.addr %s295, 2
        %s297 = smul.addr %s293, 32
        %s298 = sadd.s32 %s296, %s297
        %s299 = smul.addr %s298, 8
        %s300 = scalar_lea.vmem %s1, %s299
        %s301 = smul.u32 8, %s21
      $region40: #{tpu_custom_call.1} parent=31 // pred_fallthru
        _
      // Predicated region
      $region41: #{tpu_custom_call.1} parent=31 // pred_check
        %p302 = pneg %p119
      $region42: #{tpu_custom_call.1} parent=31 // pred_check_branch
        %304 = sbr.rel (%p302) target = $region44
      $region43: #{tpu_custom_call.1} parent=31 // pred_region
        %s305 = sadd.s32 %s21, 1
        %s306 = smul.u32 %s305, 8
        %p307 = scmp.lt.s32.totalorder %s306, 15
        %s308 = scalar_select %p307, %s306, 15
        %p309 = scmp.lt.s32.totalorder %s20, 1
        %s310 = scalar_select %p309, %s20, 1
        %p311 = scmp.lt.s32.totalorder %s308, 15
        %s312 = scalar_select %p311, %s308, 15
        %s313 = smul.addr %s312, 2
        %s314 = smul.addr %s310, 32
        %s315 = sadd.s32 %s313, %s314
        %s316 = smul.addr %s315, 8
        %s317 = scalar_lea.vmem %s2, %s316
        %s318 = sadd.s32 %s21, 1
        %s319 = smul.u32 %s318, 8
        %p320 = scmp.lt.s32.totalorder %s319, 15
        %s321 = scalar_select %p320, %s319, 15
      $region44: #{tpu_custom_call.1} parent=31 // pred_fallthru
        _
    $region32: #{tpu_custom_call.1} parent=5 // pred_fallthru
      _
    %p322 = scmp.le.s32.totalorder 1, %s13
    %p323 = scmp.lt.s32.totalorder %s13, 5
    %p324 = pnand %p322, %p323
    %p325 = pneg %p324
    // Predicated region
    $region45: #{tpu_custom_call.1} parent=5 // pred_check
      _
    $region46: #{tpu_custom_call.1} parent=5 // pred_check_branch
      %327 = sbr.rel (%p324) target = $region48
    $region47: #{tpu_custom_call.1} parent=5 // pred_region
      %s328 = ssub.s32 %s13, 1
      %s329 = smul.u32 %s23, 8
      %s330 = ssub.s32 %s329, 1
      %p331 = scmp.gt.s32.totalorder %s330, 0
      %s332 = scalar_select %p331, %s330, 0
      %p333 = scmp.lt.s32.totalorder %s22, 1
      %s334 = scalar_select %p333, %s22, 1
      %p335 = scmp.lt.s32.totalorder %s332, 15
      %s336 = scalar_select %p335, %s332, 15
      %s337 = smul.addr %s336, 2
      %s338 = smul.addr %s334, 32
      %s339 = sadd.s32 %s337, %s338
      %s340 = smul.addr %s339, 8
      %s341 = scalar_lea.vmem %s0, %s340
      %p342 = pneg %p61
      %p343 = pneg %p58
      %s344 = smul.u32 8, %s23
      %p345 = scmp.lt.s32.totalorder %s22, 1
      %s346 = scalar_select %p345, %s22, 1
      %p347 = scmp.lt.s32.totalorder %s344, 15
      %s348 = scalar_select %p347, %s344, 15
      %s349 = smul.addr %s348, 2
      %s350 = smul.addr %s346, 32
      %s351 = sadd.s32 %s349, %s350
      %s352 = smul.addr %s351, 8
      %s353 = scalar_lea.vmem %s1, %s352
      %p354 = pneg %p89
      %p355 = pneg %p86
      %s356 = sadd.s32 %s23, 1
      %s357 = smul.u32 %s356, 8
      %p358 = scmp.lt.s32.totalorder %s357, 15
      %s359 = scalar_select %p358, %s357, 15
      %p360 = scmp.lt.s32.totalorder %s22, 1
      %s361 = scalar_select %p360, %s22, 1
      %p362 = scmp.lt.s32.totalorder %s359, 15
      %s363 = scalar_select %p362, %s359, 15
      %s364 = smul.addr %s363, 2
      %s365 = smul.addr %s361, 32
      %s366 = sadd.s32 %s364, %s365
      %s367 = smul.addr %s366, 8
      %s368 = scalar_lea.vmem %s2, %s367
      %p369 = pneg %p125
      %p370 = pneg %p122
      %p371 = pneg %p146
      %p372 = pneg %p143
      %p373 = pneg %p167
      %p374 = pneg %p164
      %p375 = pneg %p188
      %p376 = pneg %p185
      %p377 = pneg %p209
      %p378 = pneg %p206
      %p379 = pneg %p237
      %p380 = pneg %p234
      %s381 = smul.u32 8, %s23
      %p382 = scmp.lt.s32.totalorder %s22, 1
      %s383 = scalar_select %p382, %s22, 1
      %p384 = scmp.lt.s32.totalorder %s381, 15
      %s385 = scalar_select %p384, %s381, 15
      %s386 = smul.addr %s385, 2
      %s387 = smul.addr %s383, 32
      %s388 = sadd.s32 %s386, %s387
      %s389 = smul.addr %s388, 8
      %s390 = scalar_lea.vmem %s7, %s389
      %s391 = smul.u32 %s23, 8
      %s392 = ssub.s32 %s391, 1
      %p393 = scmp.gt.s32.totalorder %s392, 0
      %s394 = scalar_select %p393, %s392, 0
      %p395 = scmp.lt.s32.totalorder %s22, 1
      %s396 = scalar_select %p395, %s22, 1
      %p397 = scmp.lt.s32.totalorder %s394, 15
      %s398 = scalar_select %p397, %s394, 15
      %s399 = smul.addr %s398, 2
      %s400 = smul.addr %s396, 32
      %s401 = sadd.s32 %s399, %s400
      %s402 = smul.addr %s401, 8
      %s403 = scalar_lea.vmem %s0, %s402
      %s404 = smul.u32 %s23, 8
      %s405 = ssub.s32 %s404, 1
      %p406 = scmp.gt.s32.totalorder %s405, 0
      %s407 = scalar_select %p406, %s405, 0
      %s408 = smul.u32 8, %s23
      %p409 = scmp.lt.s32.totalorder %s22, 1
      %s410 = scalar_select %p409, %s22, 1
      %p411 = scmp.lt.s32.totalorder %s408, 15
      %s412 = scalar_select %p411, %s408, 15
      %s413 = smul.addr %s412, 2
      %s414 = smul.addr %s410, 32
      %s415 = sadd.s32 %s413, %s414
      %s416 = smul.addr %s415, 8
      %s417 = scalar_lea.vmem %s1, %s416
      %s418 = smul.u32 8, %s23
      %s419 = sadd.s32 %s23, 1
      %s420 = smul.u32 %s419, 8
      %p421 = scmp.lt.s32.totalorder %s420, 15
      %s422 = scalar_select %p421, %s420, 15
      %p423 = scmp.lt.s32.totalorder %s22, 1
      %s424 = scalar_select %p423, %s22, 1
      %p425 = scmp.lt.s32.totalorder %s422, 15
      %s426 = scalar_select %p425, %s422, 15
      %s427 = smul.addr %s426, 2
      %s428 = smul.addr %s424, 32
      %s429 = sadd.s32 %s427, %s428
      %s430 = smul.addr %s429, 8
      %s431 = scalar_lea.vmem %s2, %s430
      %s432 = sadd.s32 %s23, 1
      %s433 = smul.u32 %s432, 8
      %p434 = scmp.lt.s32.totalorder %s433, 15
      %s435 = scalar_select %p434, %s433, 15
      %s436 = smul.u32 8, %s23
      %p437 = scmp.lt.s32.totalorder %s22, 1
      %s438 = scalar_select %p437, %s22, 1
      %p439 = scmp.lt.s32.totalorder %s436, 15
      %s440 = scalar_select %p439, %s436, 15
      %s441 = smul.addr %s440, 2
      %s442 = smul.addr %s438, 32
      %s443 = sadd.s32 %s441, %s442
      %s444 = smul.addr %s443, 8
      %s445 = scalar_lea.vmem %s7, %s444
      %s446 = smul.u32 8, %s23
      %v448 = vld [vmem:[%s403] sm:$0xff]
      %v449 = vld [vmem:[%s403 + $0x8] sm:$0xff]
      %v450 = vpack.c.bf16 %v448, %v448
      %v451 = vpack.c.bf16 %v449, %v449
      %v452 = vld [vmem:[%s417] sm:$0xff]
      %v453 = vld [vmem:[%s417 + $0x8] sm:$0xff]
      %v454 = vld [vmem:[%s417 + $0x10] sm:$0xff]
      %v455 = vld [vmem:[%s417 + $0x18] sm:$0xff]
      %v456 = vld [vmem:[%s417 + $0x20] sm:$0xff]
      %v457 = vld [vmem:[%s417 + $0x28] sm:$0xff]
      %v458 = vld [vmem:[%s417 + $0x30] sm:$0xff]
      %v459 = vld [vmem:[%s417 + $0x38] sm:$0xff]
      %v460 = vld [vmem:[%s417 + $0x40] sm:$0xff]
      %v461 = vld [vmem:[%s417 + $0x48] sm:$0xff]
      %v462 = vld [vmem:[%s417 + $0x50] sm:$0xff]
      %v463 = vld [vmem:[%s417 + $0x58] sm:$0xff]
      %v464 = vld [vmem:[%s417 + $0x60] sm:$0xff]
      %v465 = vld [vmem:[%s417 + $0x68] sm:$0xff]
      %v466 = vld [vmem:[%s417 + $0x70] sm:$0xff]
      %v467 = vld [vmem:[%s417 + $0x78] sm:$0xff]
      %v468 = vpack.c.bf16 %v452, %v452
      %v469 = vpack.c.bf16 %v453, %v453
      %v470 = vpack.c.bf16 %v454, %v454
      %v471 = vpack.c.bf16 %v455, %v455
      %v472 = vpack.c.bf16 %v456, %v456
      %v473 = vpack.c.bf16 %v457, %v457
      %v474 = vpack.c.bf16 %v458, %v458
      %v475 = vpack.c.bf16 %v459, %v459
      %v476 = vpack.c.bf16 %v460, %v460
      %v477 = vpack.c.bf16 %v461, %v461
      %v478 = vpack.c.bf16 %v462, %v462
      %v479 = vpack.c.bf16 %v463, %v463
      %v480 = vpack.c.bf16 %v464, %v464
      %v481 = vpack.c.bf16 %v465, %v465
      %v482 = vpack.c.bf16 %v466, %v466
      %v483 = vpack.c.bf16 %v467, %v467
      %v484 = vld [vmem:[%s431] sm:$0xff]
      %v485 = vld [vmem:[%s431 + $0x8] sm:$0xff]
      %v486 = vpack.c.bf16 %v484, %v484
      %v487 = vpack.c.bf16 %v485, %v485
      %v488 = vld [vmem:[%s3] sm:$0x3]
      %v489 = vld [vmem:[%s4] sm:$0x1]
      %v491 = vperm.slane %v489, 0
      %v513 = vunpack.c.l.b16 %v450
      %v514 = vunpack.c.l.b16 %v451
      %v515 = vunpack.c.l.b16 %v468
      %v516 = vunpack.c.l.b16 %v469
      %v517 = vunpack.c.l.b16 %v470
      %v518 = vunpack.c.l.b16 %v471
      %v519 = vunpack.c.l.b16 %v472
      %v520 = vunpack.c.l.b16 %v473
      %v521 = vunpack.c.l.b16 %v474
      %v522 = vunpack.c.l.b16 %v475
      %v523 = vunpack.c.l.b16 %v476
      %v524 = vunpack.c.l.b16 %v477
      %v525 = vunpack.c.l.b16 %v478
      %v526 = vunpack.c.l.b16 %v479
      %v527 = vunpack.c.l.b16 %v480
      %v528 = vunpack.c.l.b16 %v481
      %v529 = vunpack.c.l.b16 %v482
      %v530 = vunpack.c.l.b16 %v483
      %v531 = vunpack.c.l.b16 %v486
      %v532 = vunpack.c.l.b16 %v487
      %v533 = vpack.c.b16 %v514, %v513
      %v534 = vpack.c.b16 %v516, %v515
      %v535 = vpack.c.b16 %v518, %v517
      %v536 = vpack.c.b16 %v520, %v519
      %v537 = vpack.c.b16 %v522, %v521
      %v538 = vpack.c.b16 %v524, %v523
      %v539 = vpack.c.b16 %v526, %v525
      %v540 = vpack.c.b16 %v528, %v527
      %v541 = vpack.c.b16 %v530, %v529
      %v542 = vpack.c.b16 %v532, %v531
      %vm543 = vcmask 31744
      %v545 = vsel %vm543, %v533, 0
      %v548 = vsel %vm543, %v534, 0
      %v551 = vsel %vm543, %v535, 0
      %v554 = vsel %vm543, %v536, 0
      %v557 = vsel %vm543, %v537, 0
      %v560 = vsel %vm543, %v538, 0
      %v563 = vsel %vm543, %v539, 0
      %v566 = vsel %vm543, %v540, 0
      %v569 = vsel %vm543, %v541, 0
      %v572 = vsel %vm543, %v542, 0
      %vm574 = vcmask 1041408
      %v576 = vsel %vm574, %v488, 0
      %578 = vmatpush.bf16.msra.mxu0 0
      %579 = vmatpush.bf16.msra.mxu0 0
      %580 = vmatpush.bf16.msra.mxu0 0
      %581 = vmatpush.bf16.msra.mxu0 0
      %582 = vmatpush.bf16.msra.mxu0 0
      %583 = vmatpush.bf16.msra.mxu0 0
      %584 = vmatpush.bf16.msra.mxu0 0
      %585 = vmatpush.bf16.msra.mxu0 %v576
      %586 = vmatmul.bf16.gmra.mxu0 %v545
      %v587 = vpop.f32.mrf.mxu0
      %v588 = vadd.f32 %v491, %v587
      %v589 = vpop.f32.mrf.mxu0
      %v590 = vadd.f32 %v491, %v589
      %591 = vmatmul.bf16.gmra.mxu0 %v548
      %v592 = vpop.f32.mrf.mxu0
      %v593 = vadd.f32 %v491, %v592
      %v594 = vpop.f32.mrf.mxu0
      %v595 = vadd.f32 %v491, %v594
      %596 = vmatmul.bf16.gmra.mxu0 %v551
      %v597 = vpop.f32.mrf.mxu0
      %v598 = vadd.f32 %v491, %v597
      %v599 = vpop.f32.mrf.mxu0
      %v600 = vadd.f32 %v491, %v599
      %601 = vmatmul.bf16.gmra.mxu0 %v554
      %v602 = vpop.f32.mrf.mxu0
      %v603 = vadd.f32 %v491, %v602
      %v604 = vpop.f32.mrf.mxu0
      %v605 = vadd.f32 %v491, %v604
      %606 = vmatmul.bf16.gmra.mxu0 %v557
      %v607 = vpop.f32.mrf.mxu0
      %v608 = vadd.f32 %v491, %v607
      %v609 = vpop.f32.mrf.mxu0
      %v610 = vadd.f32 %v491, %v609
      %611 = vmatmul.bf16.gmra.mxu0 %v560
      %v612 = vpop.f32.mrf.mxu0
      %v613 = vadd.f32 %v491, %v612
      %v614 = vpop.f32.mrf.mxu0
      %v615 = vadd.f32 %v491, %v614
      %616 = vmatmul.bf16.gmra.mxu0 %v563
      %v617 = vpop.f32.mrf.mxu0
      %v618 = vadd.f32 %v491, %v617
      %v619 = vpop.f32.mrf.mxu0
      %v620 = vadd.f32 %v491, %v619
      %621 = vmatmul.bf16.gmra.mxu0 %v566
      %v622 = vpop.f32.mrf.mxu0
      %v623 = vadd.f32 %v491, %v622
      %v624 = vpop.f32.mrf.mxu0
      %v625 = vadd.f32 %v491, %v624
      %626 = vmatmul.bf16.gmra.mxu0 %v569
      %v627 = vpop.f32.mrf.mxu0
      %v628 = vadd.f32 %v491, %v627
      %v629 = vpop.f32.mrf.mxu0
      %v630 = vadd.f32 %v491, %v629
      %631 = vmatmul.bf16.gmra.mxu0 %v572
      %v632 = vpop.f32.mrf.mxu0
      %v633 = vadd.f32 %v491, %v632
      %v634 = vpop.f32.mrf.mxu0
      %v635 = vadd.f32 %v491, %v634
      %636 = vdwg.mxu0
      %v637 = vmul.f32 %v588, 0.1
      %v638 = vmul.f32 %v590, 0.1
      %v639 = vmul.f32 %v593, 0.1
      %v640 = vmul.f32 %v595, 0.1
      %v641 = vmul.f32 %v598, 0.1
      %v642 = vmul.f32 %v600, 0.1
      %v643 = vmul.f32 %v603, 0.1
      %v644 = vmul.f32 %v605, 0.1
      %v645 = vmul.f32 %v608, 0.1
      %v646 = vmul.f32 %v610, 0.1
      %v647 = vmul.f32 %v613, 0.1
      %v648 = vmul.f32 %v615, 0.1
      %v649 = vmul.f32 %v618, 0.1
      %v650 = vmul.f32 %v620, 0.1
      %v651 = vmul.f32 %v623, 0.1
      %v652 = vmul.f32 %v625, 0.1
      %v653 = vmul.f32 %v628, 0.1
      %v654 = vmul.f32 %v630, 0.1
      %v655 = vmul.f32 %v633, 0.1
      %v656 = vmul.f32 %v635, 0.1
      %v657 = vmax.f32 %v588, %v637
      %v658 = vmax.f32 %v590, %v638
      %v659 = vmax.f32 %v593, %v639
      %v660 = vmax.f32 %v595, %v640
      %v661 = vmax.f32 %v598, %v641
      %v662 = vmax.f32 %v600, %v642
      %v663 = vmax.f32 %v603, %v643
      %v664 = vmax.f32 %v605, %v644
      %v665 = vmax.f32 %v608, %v645
      %v666 = vmax.f32 %v610, %v646
      %v667 = vmax.f32 %v613, %v647
      %v668 = vmax.f32 %v615, %v648
      %v669 = vmax.f32 %v618, %v649
      %v670 = vmax.f32 %v620, %v650
      %v671 = vmax.f32 %v623, %v651
      %v672 = vmax.f32 %v625, %v652
      %v673 = vmax.f32 %v628, %v653
      %v674 = vmax.f32 %v630, %v654
      %v675 = vmax.f32 %v633, %v655
      %v676 = vmax.f32 %v635, %v656
      %p677 = scmp.eq.s32.totalorder %s23, 0
      %p678 = scmp.eq.s32.totalorder %s23, 1
      %s679 = scalar_select %p677, 1, 0
      %v680 = vstv %s679
      %vm681 = vcmp.eq.s32.totalorder %v680, 1
      %s682 = scalar_select %p678, 1, 0
      %v683 = vstv %s682
      %vm684 = vcmp.eq.s32.totalorder %v683, 1
      %v685 = vsel %vm681, 1, 0
      %v686 = vsel %vm684, 1, 0
      %vm687 = vcmp.eq.s32.totalorder %v685, 1
      %vm688 = vcmp.eq.s32.totalorder %v686, 1
      %v689 = vsel %vm687, 0.0, %v657
      %v690 = vsel %vm687, 0.0, %v658
      %v691 = vsel 0, 0.0, %v659
      %v692 = vsel 0, 0.0, %v660
      %v693 = vsel 0, 0.0, %v661
      %v694 = vsel 0, 0.0, %v662
      %v695 = vsel 0, 0.0, %v663
      %v696 = vsel 0, 0.0, %v664
      %v697 = vsel 0, 0.0, %v665
      %v698 = vsel 0, 0.0, %v666
      %v699 = vsel 0, 0.0, %v667
      %v700 = vsel 0, 0.0, %v668
      %v701 = vsel 0, 0.0, %v669
      %v702 = vsel 0, 0.0, %v670
      %v703 = vsel 0, 0.0, %v671
      %v704 = vsel 0, 0.0, %v672
      %v705 = vsel 0, 0.0, %v673
      %v706 = vsel 0, 0.0, %v674
      %v707 = vsel %vm688, 0.0, %v675
      %v708 = vsel %vm688, 0.0, %v676
      %v709 = vpack.c.bf16 %v689, %v689
      %v710 = vpack.c.bf16 %v690, %v690
      %v711 = vpack.c.bf16 %v691, %v691
      %v712 = vpack.c.bf16 %v692, %v692
      %v713 = vpack.c.bf16 %v693, %v693
      %v714 = vpack.c.bf16 %v694, %v694
      %v715 = vpack.c.bf16 %v695, %v695
      %v716 = vpack.c.bf16 %v696, %v696
      %v717 = vpack.c.bf16 %v697, %v697
      %v718 = vpack.c.bf16 %v698, %v698
      %v719 = vpack.c.bf16 %v699, %v699
      %v720 = vpack.c.bf16 %v700, %v700
      %v721 = vpack.c.bf16 %v701, %v701
      %v722 = vpack.c.bf16 %v702, %v702
      %v723 = vpack.c.bf16 %v703, %v703
      %v724 = vpack.c.bf16 %v704, %v704
      %v725 = vpack.c.bf16 %v705, %v705
      %v726 = vpack.c.bf16 %v706, %v706
      %v727 = vpack.c.bf16 %v707, %v707
      %v728 = vpack.c.bf16 %v708, %v708
      %v749 = vunpack.c.l.b16 %v709
      %v750 = vunpack.c.l.b16 %v710
      %v751 = vunpack.c.l.b16 %v711
      %v752 = vunpack.c.l.b16 %v712
      %v753 = vunpack.c.l.b16 %v713
      %v754 = vunpack.c.l.b16 %v714
      %v755 = vunpack.c.l.b16 %v715
      %v756 = vunpack.c.l.b16 %v716
      %v757 = vunpack.c.l.b16 %v717
      %v758 = vunpack.c.l.b16 %v718
      %v759 = vunpack.c.l.b16 %v719
      %v760 = vunpack.c.l.b16 %v720
      %v761 = vunpack.c.l.b16 %v721
      %v762 = vunpack.c.l.b16 %v722
      %v763 = vunpack.c.l.b16 %v723
      %v764 = vunpack.c.l.b16 %v724
      %v765 = vunpack.c.l.b16 %v725
      %v766 = vunpack.c.l.b16 %v726
      %v767 = vunpack.c.l.b16 %v727
      %v768 = vunpack.c.l.b16 %v728
      %v769 = vpack.c.b16 %v750, %v749
      %v770 = vpack.c.b16 %v752, %v751
      %v771 = vpack.c.b16 %v754, %v753
      %v772 = vpack.c.b16 %v756, %v755
      %v773 = vpack.c.b16 %v758, %v757
      %v774 = vpack.c.b16 %v760, %v759
      %v775 = vpack.c.b16 %v762, %v761
      %v776 = vpack.c.b16 %v764, %v763
      %v777 = vpack.c.b16 %v766, %v765
      %v778 = vpack.c.b16 %v768, %v767
      %v780 = vshrl.u32 %v769, 16
      %v782 = vrot.slane %v780, 7
      %v783 = vshll.u32 %v769, 16
      %v785 = vor.u32 %v782, %v783
      %v787 = vshrl.u32 %v770, 16
      %v789 = vrot.slane %v787, 7
      %v790 = vshll.u32 %v770, 16
      %v792 = vor.u32 %v789, %v790
      %v794 = vshrl.u32 %v771, 16
      %v796 = vrot.slane %v794, 7
      %v797 = vshll.u32 %v771, 16
      %v799 = vor.u32 %v796, %v797
      %v801 = vshrl.u32 %v772, 16
      %v803 = vrot.slane %v801, 7
      %v804 = vshll.u32 %v772, 16
      %v806 = vor.u32 %v803, %v804
      %v808 = vshrl.u32 %v773, 16
      %v810 = vrot.slane %v808, 7
      %v811 = vshll.u32 %v773, 16
      %v813 = vor.u32 %v810, %v811
      %v815 = vshrl.u32 %v774, 16
      %v817 = vrot.slane %v815, 7
      %v818 = vshll.u32 %v774, 16
      %v820 = vor.u32 %v817, %v818
      %v822 = vshrl.u32 %v775, 16
      %v824 = vrot.slane %v822, 7
      %v825 = vshll.u32 %v775, 16
      %v827 = vor.u32 %v824, %v825
      %v829 = vshrl.u32 %v776, 16
      %v831 = vrot.slane %v829, 7
      %v832 = vshll.u32 %v776, 16
      %v834 = vor.u32 %v831, %v832
      %v836 = vshrl.u32 %v777, 16
      %v838 = vrot.slane %v836, 7
      %v839 = vshll.u32 %v777, 16
      %v841 = vor.u32 %v838, %v839
      %v843 = vshrl.u32 %v778, 16
      %v845 = vrot.slane %v843, 7
      %v846 = vshll.u32 %v778, 16
      %v848 = vor.u32 %v845, %v846
      %vm869 = vcmask 1040384
      %vm870 = vsmask.f32 256
      %vm871 = vmand %vm869, %vm870
      %v872 = vsel %vm871, 0, %v785
      %v873 = vsel %vm871, 0, %v792
      %v874 = vsel %vm871, 0, %v799
      %v875 = vsel %vm871, 0, %v806
      %v876 = vsel %vm871, 0, %v813
      %v877 = vsel %vm871, 0, %v820
      %v878 = vsel %vm871, 0, %v827
      %v879 = vsel %vm871, 0, %v834
      %v880 = vsel %vm871, 0, %v841
      %v881 = vsel %vm871, 0, %v848
      %v882 = vsel %vm871, %v782, 0
      %v883 = vsel %vm871, %v789, 0
      %v884 = vsel %vm871, %v796, 0
      %v885 = vsel %vm871, %v803, 0
      %v886 = vsel %vm871, %v810, 0
      %v887 = vsel %vm871, %v817, 0
      %v888 = vsel %vm871, %v824, 0
      %v889 = vsel %vm871, %v831, 0
      %v890 = vsel %vm871, %v838, 0
      %v891 = vsel %vm871, %v845, 0
      %v892 = vld [vmem:[%s5] sm:$0x1]
      %vm893 = vsmask.f32 7424
      %v895 = vshrl.u32 %v872, 16
      %v897 = vshll.u32 %v872, 16
      %v899 = vrot.slane %v897, 1
      %v900 = vor.u32 %v895, %v899
      %v902 = vshll.u32 %v882, 16
      %v904 = vrot.slane %v902, 1
      %v905 = vsel %vm893, %v900, %v904
      %v907 = vshrl.u32 %v873, 16
      %v909 = vshll.u32 %v873, 16
      %v911 = vrot.slane %v909, 1
      %v912 = vor.u32 %v907, %v911
      %v914 = vshll.u32 %v883, 16
      %v916 = vrot.slane %v914, 1
      %v917 = vsel %vm893, %v912, %v916
      %v919 = vshrl.u32 %v874, 16
      %v921 = vshll.u32 %v874, 16
      %v923 = vrot.slane %v921, 1
      %v924 = vor.u32 %v919, %v923
      %v926 = vshll.u32 %v884, 16
      %v928 = vrot.slane %v926, 1
      %v929 = vsel %vm893, %v924, %v928
      %v931 = vshrl.u32 %v875, 16
      %v933 = vshll.u32 %v875, 16
      %v935 = vrot.slane %v933, 1
      %v936 = vor.u32 %v931, %v935
      %v938 = vshll.u32 %v885, 16
      %v940 = vrot.slane %v938, 1
      %v941 = vsel %vm893, %v936, %v940
      %v943 = vshrl.u32 %v876, 16
      %v945 = vshll.u32 %v876, 16
      %v947 = vrot.slane %v945, 1
      %v948 = vor.u32 %v943, %v947
      %v950 = vshll.u32 %v886, 16
      %v952 = vrot.slane %v950, 1
      %v953 = vsel %vm893, %v948, %v952
      %v955 = vshrl.u32 %v877, 16
      %v957 = vshll.u32 %v877, 16
      %v959 = vrot.slane %v957, 1
      %v960 = vor.u32 %v955, %v959
      %v962 = vshll.u32 %v887, 16
      %v964 = vrot.slane %v962, 1
      %v965 = vsel %vm893, %v960, %v964
      %v967 = vshrl.u32 %v878, 16
      %v969 = vshll.u32 %v878, 16
      %v971 = vrot.slane %v969, 1
      %v972 = vor.u32 %v967, %v971
      %v974 = vshll.u32 %v888, 16
      %v976 = vrot.slane %v974, 1
      %v977 = vsel %vm893, %v972, %v976
      %v979 = vshrl.u32 %v879, 16
      %v981 = vshll.u32 %v879, 16
      %v983 = vrot.slane %v981, 1
      %v984 = vor.u32 %v979, %v983
      %v986 = vshll.u32 %v889, 16
      %v988 = vrot.slane %v986, 1
      %v989 = vsel %vm893, %v984, %v988
      %s990 = scalar_lea.vmem %s5, 1
      %v991 = vld [vmem:[%s990] sm:$0x1]
      %vm992 = vcmask 15360
      %v994 = vsel %vm992, %v905, 0
      %v997 = vsel %vm992, %v917, 0
      %v1000 = vsel %vm992, %v929, 0
      %v1003 = vsel %vm992, %v941, 0
      %v1006 = vsel %vm992, %v953, 0
      %v1009 = vsel %vm992, %v965, 0
      %v1012 = vsel %vm992, %v977, 0
      %v1015 = vsel %vm992, %v989, 0
      %vm1017 = vcmask 1040384
      %v1019 = vsel %vm1017, %v991, 0
      %1021 = vmatpush.bf16.msra.mxu0 0
      %1022 = vmatpush.bf16.msra.mxu0 0
      %1023 = vmatpush.bf16.msra.mxu0 0
      %1024 = vmatpush.bf16.msra.mxu0 0
      %1025 = vmatpush.bf16.msra.mxu0 0
      %1026 = vmatpush.bf16.msra.mxu0 0
      %1027 = vmatpush.bf16.msra.mxu0 0
      %1028 = vmatpush.bf16.msra.mxu0 %v1019
      %1029 = vmatmul.bf16.gmra.mxu0 %v994
      %v1030 = vpop.f32.mrf.mxu0
      %v1031 = vadd.f32 0.0, %v1030
      %v1032 = vpop.f32.mrf.mxu0
      %v1033 = vadd.f32 0.0, %v1032
      %1034 = vmatmul.bf16.gmra.mxu0 %v997
      %v1035 = vpop.f32.mrf.mxu0
      %v1036 = vadd.f32 0.0, %v1035
      %v1037 = vpop.f32.mrf.mxu0
      %v1038 = vadd.f32 0.0, %v1037
      %1039 = vmatmul.bf16.gmra.mxu0 %v1000
      %v1040 = vpop.f32.mrf.mxu0
      %v1041 = vadd.f32 0.0, %v1040
      %v1042 = vpop.f32.mrf.mxu0
      %v1043 = vadd.f32 0.0, %v1042
      %1044 = vmatmul.bf16.gmra.mxu0 %v1003
      %v1045 = vpop.f32.mrf.mxu0
      %v1046 = vadd.f32 0.0, %v1045
      %v1047 = vpop.f32.mrf.mxu0
      %v1048 = vadd.f32 0.0, %v1047
      %1049 = vmatmul.bf16.gmra.mxu0 %v1006
      %v1050 = vpop.f32.mrf.mxu0
      %v1051 = vadd.f32 0.0, %v1050
      %v1052 = vpop.f32.mrf.mxu0
      %v1053 = vadd.f32 0.0, %v1052
      %1054 = vmatmul.bf16.gmra.mxu0 %v1009
      %v1055 = vpop.f32.mrf.mxu0
      %v1056 = vadd.f32 0.0, %v1055
      %v1057 = vpop.f32.mrf.mxu0
      %v1058 = vadd.f32 0.0, %v1057
      %1059 = vmatmul.bf16.gmra.mxu0 %v1012
      %v1060 = vpop.f32.mrf.mxu0
      %v1061 = vadd.f32 0.0, %v1060
      %v1062 = vpop.f32.mrf.mxu0
      %v1063 = vadd.f32 0.0, %v1062
      %1064 = vmatmul.bf16.gmra.mxu0 %v1015
      %v1065 = vpop.f32.mrf.mxu0
      %v1066 = vadd.f32 0.0, %v1065
      %v1067 = vpop.f32.mrf.mxu0
      %v1068 = vadd.f32 0.0, %v1067
      %1069 = vdwg.mxu0
      %v1070 = vsel %vm992, %v872, 0
      %v1072 = vsel %vm992, %v873, 0
      %v1074 = vsel %vm992, %v874, 0
      %v1076 = vsel %vm992, %v875, 0
      %v1078 = vsel %vm992, %v876, 0
      %v1080 = vsel %vm992, %v877, 0
      %v1082 = vsel %vm992, %v878, 0
      %v1084 = vsel %vm992, %v879, 0
      %v1087 = vsel %vm1017, %v892, 0
      %1089 = vmatpush.bf16.msra.mxu0 0
      %1090 = vmatpush.bf16.msra.mxu0 0
      %1091 = vmatpush.bf16.msra.mxu0 0
      %1092 = vmatpush.bf16.msra.mxu0 0
      %1093 = vmatpush.bf16.msra.mxu0 0
      %1094 = vmatpush.bf16.msra.mxu0 0
      %1095 = vmatpush.bf16.msra.mxu0 0
      %1096 = vmatpush.bf16.msra.mxu0 %v1087
      %1097 = vmatmul.bf16.gmra.mxu0 %v1070
      %v1098 = vpop.f32.mrf.mxu0
      %v1099 = vadd.f32 %v1031, %v1098
      %v1100 = vpop.f32.mrf.mxu0
      %v1101 = vadd.f32 %v1033, %v1100
      %1102 = vmatmul.bf16.gmra.mxu0 %v1072
      %v1103 = vpop.f32.mrf.mxu0
      %v1104 = vadd.f32 %v1036, %v1103
      %v1105 = vpop.f32.mrf.mxu0
      %v1106 = vadd.f32 %v1038, %v1105
      %1107 = vmatmul.bf16.gmra.mxu0 %v1074
      %v1108 = vpop.f32.mrf.mxu0
      %v1109 = vadd.f32 %v1041, %v1108
      %v1110 = vpop.f32.mrf.mxu0
      %v1111 = vadd.f32 %v1043, %v1110
      %1112 = vmatmul.bf16.gmra.mxu0 %v1076
      %v1113 = vpop.f32.mrf.mxu0
      %v1114 = vadd.f32 %v1046, %v1113
      %v1115 = vpop.f32.mrf.mxu0
      %v1116 = vadd.f32 %v1048, %v1115
      %1117 = vmatmul.bf16.gmra.mxu0 %v1078
      %v1118 = vpop.f32.mrf.mxu0
      %v1119 = vadd.f32 %v1051, %v1118
      %v1120 = vpop.f32.mrf.mxu0
      %v1121 = vadd.f32 %v1053, %v1120
      %1122 = vmatmul.bf16.gmra.mxu0 %v1080
      %v1123 = vpop.f32.mrf.mxu0
      %v1124 = vadd.f32 %v1056, %v1123
      %v1125 = vpop.f32.mrf.mxu0
      %v1126 = vadd.f32 %v1058, %v1125
      %1127 = vmatmul.bf16.gmra.mxu0 %v1082
      %v1128 = vpop.f32.mrf.mxu0
      %v1129 = vadd.f32 %v1061, %v1128
      %v1130 = vpop.f32.mrf.mxu0
      %v1131 = vadd.f32 %v1063, %v1130
      %1132 = vmatmul.bf16.gmra.mxu0 %v1084
      %v1133 = vpop.f32.mrf.mxu0
      %v1134 = vadd.f32 %v1066, %v1133
      %v1135 = vpop.f32.mrf.mxu0
      %v1136 = vadd.f32 %v1068, %v1135
      %1137 = vdwg.mxu0
      %vm1154 = vcmask 1046528
      %v1155 = vrot.slane %v872, 1
      %v1156 = vrot.slane %v882, 1
      %v1157 = vsel %vm1154, %v1155, %v1156
      %v1158 = vrot.slane %v873, 1
      %v1159 = vrot.slane %v883, 1
      %v1160 = vsel %vm1154, %v1158, %v1159
      %v1161 = vrot.slane %v874, 1
      %v1162 = vrot.slane %v884, 1
      %v1163 = vsel %vm1154, %v1161, %v1162
      %v1164 = vrot.slane %v875, 1
      %v1165 = vrot.slane %v885, 1
      %v1166 = vsel %vm1154, %v1164, %v1165
      %v1167 = vrot.slane %v876, 1
      %v1168 = vrot.slane %v886, 1
      %v1169 = vsel %vm1154, %v1167, %v1168
      %v1170 = vrot.slane %v877, 1
      %v1171 = vrot.slane %v887, 1
      %v1172 = vsel %vm1154, %v1170, %v1171
      %v1173 = vrot.slane %v878, 1
      %v1174 = vrot.slane %v888, 1
      %v1175 = vsel %vm1154, %v1173, %v1174
      %v1176 = vrot.slane %v879, 1
      %v1177 = vrot.slane %v889, 1
      %v1178 = vsel %vm1154, %v1176, %v1177
      %s1179 = scalar_lea.vmem %s5, 2
      %v1180 = vld [vmem:[%s1179] sm:$0x1]
      %v1182 = vsel %vm992, %v1157, 0
      %v1185 = vsel %vm992, %v1160, 0
      %v1188 = vsel %vm992, %v1163, 0
      %v1191 = vsel %vm992, %v1166, 0
      %v1194 = vsel %vm992, %v1169, 0
      %v1197 = vsel %vm992, %v1172, 0
      %v1200 = vsel %vm992, %v1175, 0
      %v1203 = vsel %vm992, %v1178, 0
      %v1206 = vsel %vm1017, %v1180, 0
      %1208 = vmatpush.bf16.msra.mxu0 0
      %1209 = vmatpush.bf16.msra.mxu0 0
      %1210 = vmatpush.bf16.msra.mxu0 0
      %1211 = vmatpush.bf16.msra.mxu0 0
      %1212 = vmatpush.bf16.msra.mxu0 0
      %1213 = vmatpush.bf16.msra.mxu0 0
      %1214 = vmatpush.bf16.msra.mxu0 0
      %1215 = vmatpush.bf16.msra.mxu0 %v1206
      %1216 = vmatmul.bf16.gmra.mxu0 %v1182
      %v1217 = vpop.f32.mrf.mxu0
      %v1218 = vadd.f32 0.0, %v1217
      %v1219 = vpop.f32.mrf.mxu0
      %v1220 = vadd.f32 0.0, %v1219
      %1221 = vmatmul.bf16.gmra.mxu0 %v1185
      %v1222 = vpop.f32.mrf.mxu0
      %v1223 = vadd.f32 0.0, %v1222
      %v1224 = vpop.f32.mrf.mxu0
      %v1225 = vadd.f32 0.0, %v1224
      %1226 = vmatmul.bf16.gmra.mxu0 %v1188
      %v1227 = vpop.f32.mrf.mxu0
      %v1228 = vadd.f32 0.0, %v1227
      %v1229 = vpop.f32.mrf.mxu0
      %v1230 = vadd.f32 0.0, %v1229
      %1231 = vmatmul.bf16.gmra.mxu0 %v1191
      %v1232 = vpop.f32.mrf.mxu0
      %v1233 = vadd.f32 0.0, %v1232
      %v1234 = vpop.f32.mrf.mxu0
      %v1235 = vadd.f32 0.0, %v1234
      %1236 = vmatmul.bf16.gmra.mxu0 %v1194
      %v1237 = vpop.f32.mrf.mxu0
      %v1238 = vadd.f32 0.0, %v1237
      %v1239 = vpop.f32.mrf.mxu0
      %v1240 = vadd.f32 0.0, %v1239
      %1241 = vmatmul.bf16.gmra.mxu0 %v1197
      %v1242 = vpop.f32.mrf.mxu0
      %v1243 = vadd.f32 0.0, %v1242
      %v1244 = vpop.f32.mrf.mxu0
      %v1245 = vadd.f32 0.0, %v1244
      %1246 = vmatmul.bf16.gmra.mxu0 %v1200
      %v1247 = vpop.f32.mrf.mxu0
      %v1248 = vadd.f32 0.0, %v1247
      %v1249 = vpop.f32.mrf.mxu0
      %v1250 = vadd.f32 0.0, %v1249
      %1251 = vmatmul.bf16.gmra.mxu0 %v1203
      %v1252 = vpop.f32.mrf.mxu0
      %v1253 = vadd.f32 0.0, %v1252
      %v1254 = vpop.f32.mrf.mxu0
      %v1255 = vadd.f32 0.0, %v1254
      %1256 = vdwg.mxu0
      %v1257 = vadd.f32 %v1099, %v1218
      %v1258 = vadd.f32 %v1101, %v1220
      %v1259 = vadd.f32 %v1104, %v1223
      %v1260 = vadd.f32 %v1106, %v1225
      %v1261 = vadd.f32 %v1109, %v1228
      %v1262 = vadd.f32 %v1111, %v1230
      %v1263 = vadd.f32 %v1114, %v1233
      %v1264 = vadd.f32 %v1116, %v1235
      %v1265 = vadd.f32 %v1119, %v1238
      %v1266 = vadd.f32 %v1121, %v1240
      %v1267 = vadd.f32 %v1124, %v1243
      %v1268 = vadd.f32 %v1126, %v1245
      %v1269 = vadd.f32 %v1129, %v1248
      %v1270 = vadd.f32 %v1131, %v1250
      %v1271 = vadd.f32 %v1134, %v1253
      %v1272 = vadd.f32 %v1136, %v1255
      %s1273 = scalar_lea.vmem %s5, 3
      %v1274 = vld [vmem:[%s1273] sm:$0x1]
      %v1276 = vsel %vm992, %v880, 0
      %v1279 = vsel %vm1017, %v1274, 0
      %1281 = vmatpush.bf16.msra.mxu0 0
      %1282 = vmatpush.bf16.msra.mxu0 0
      %1283 = vmatpush.bf16.msra.mxu0 0
      %1284 = vmatpush.bf16.msra.mxu0 0
      %1285 = vmatpush.bf16.msra.mxu0 0
      %1286 = vmatpush.bf16.msra.mxu0 0
      %1287 = vmatpush.bf16.msra.mxu0 0
      %1288 = vmatpush.bf16.msra.mxu0 %v1279
      %1289 = vmatmul.bf16.gmra.mxu0 %v1072
      %v1290 = vpop.f32.mrf.mxu0
      %v1291 = vadd.f32 0.0, %v1290
      %v1292 = vpop.f32.mrf.mxu0
      %v1293 = vadd.f32 0.0, %v1292
      %1294 = vmatmul.bf16.gmra.mxu0 %v1074
      %v1295 = vpop.f32.mrf.mxu0
      %v1296 = vadd.f32 0.0, %v1295
      %v1297 = vpop.f32.mrf.mxu0
      %v1298 = vadd.f32 0.0, %v1297
      %1299 = vmatmul.bf16.gmra.mxu0 %v1076
      %v1300 = vpop.f32.mrf.mxu0
      %v1301 = vadd.f32 0.0, %v1300
      %v1302 = vpop.f32.mrf.mxu0
      %v1303 = vadd.f32 0.0, %v1302
      %1304 = vmatmul.bf16.gmra.mxu0 %v1078
      %v1305 = vpop.f32.mrf.mxu0
      %v1306 = vadd.f32 0.0, %v1305
      %v1307 = vpop.f32.mrf.mxu0
      %v1308 = vadd.f32 0.0, %v1307
      %1309 = vmatmul.bf16.gmra.mxu0 %v1080
      %v1310 = vpop.f32.mrf.mxu0
      %v1311 = vadd.f32 0.0, %v1310
      %v1312 = vpop.f32.mrf.mxu0
      %v1313 = vadd.f32 0.0, %v1312
      %1314 = vmatmul.bf16.gmra.mxu0 %v1082
      %v1315 = vpop.f32.mrf.mxu0
      %v1316 = vadd.f32 0.0, %v1315
      %v1317 = vpop.f32.mrf.mxu0
      %v1318 = vadd.f32 0.0, %v1317
      %1319 = vmatmul.bf16.gmra.mxu0 %v1084
      %v1320 = vpop.f32.mrf.mxu0
      %v1321 = vadd.f32 0.0, %v1320
      %v1322 = vpop.f32.mrf.mxu0
      %v1323 = vadd.f32 0.0, %v1322
      %1324 = vmatmul.bf16.gmra.mxu0 %v1276
      %v1325 = vpop.f32.mrf.mxu0
      %v1326 = vadd.f32 0.0, %v1325
      %v1327 = vpop.f32.mrf.mxu0
      %v1328 = vadd.f32 0.0, %v1327
      %1329 = vdwg.mxu0
      %v1330 = vadd.f32 %v1257, %v1291
      %v1331 = vadd.f32 %v1258, %v1293
      %v1332 = vadd.f32 %v1259, %v1296
      %v1333 = vadd.f32 %v1260, %v1298
      %v1334 = vadd.f32 %v1261, %v1301
      %v1335 = vadd.f32 %v1262, %v1303
      %v1336 = vadd.f32 %v1263, %v1306
      %v1337 = vadd.f32 %v1264, %v1308
      %v1338 = vadd.f32 %v1265, %v1311
      %v1339 = vadd.f32 %v1266, %v1313
      %v1340 = vadd.f32 %v1267, %v1316
      %v1341 = vadd.f32 %v1268, %v1318
      %v1342 = vadd.f32 %v1269, %v1321
      %v1343 = vadd.f32 %v1270, %v1323
      %v1344 = vadd.f32 %v1271, %v1326
      %v1345 = vadd.f32 %v1272, %v1328
      %v1346 = vshrl.u32 %v880, 16
      %v1348 = vshll.u32 %v880, 16
      %v1350 = vrot.slane %v1348, 1
      %v1351 = vor.u32 %v1346, %v1350
      %v1353 = vshll.u32 %v890, 16
      %v1355 = vrot.slane %v1353, 1
      %v1356 = vsel %vm893, %v1351, %v1355
      %s1357 = scalar_lea.vmem %s5, 4
      %v1358 = vld [vmem:[%s1357] sm:$0x1]
      %v1360 = vsel %vm992, %v1356, 0
      %v1363 = vsel %vm1017, %v1358, 0
      %1365 = vmatpush.bf16.msra.mxu0 0
      %1366 = vmatpush.bf16.msra.mxu0 0
      %1367 = vmatpush.bf16.msra.mxu0 0
      %1368 = vmatpush.bf16.msra.mxu0 0
      %1369 = vmatpush.bf16.msra.mxu0 0
      %1370 = vmatpush.bf16.msra.mxu0 0
      %1371 = vmatpush.bf16.msra.mxu0 0
      %1372 = vmatpush.bf16.msra.mxu0 %v1363
      %1373 = vmatmul.bf16.gmra.mxu0 %v997
      %v1374 = vpop.f32.mrf.mxu0
      %v1375 = vadd.f32 0.0, %v1374
      %v1376 = vpop.f32.mrf.mxu0
      %v1377 = vadd.f32 0.0, %v1376
      %1378 = vmatmul.bf16.gmra.mxu0 %v1000
      %v1379 = vpop.f32.mrf.mxu0
      %v1380 = vadd.f32 0.0, %v1379
      %v1381 = vpop.f32.mrf.mxu0
      %v1382 = vadd.f32 0.0, %v1381
      %1383 = vmatmul.bf16.gmra.mxu0 %v1003
      %v1384 = vpop.f32.mrf.mxu0
      %v1385 = vadd.f32 0.0, %v1384
      %v1386 = vpop.f32.mrf.mxu0
      %v1387 = vadd.f32 0.0, %v1386
      %1388 = vmatmul.bf16.gmra.mxu0 %v1006
      %v1389 = vpop.f32.mrf.mxu0
      %v1390 = vadd.f32 0.0, %v1389
      %v1391 = vpop.f32.mrf.mxu0
      %v1392 = vadd.f32 0.0, %v1391
      %1393 = vmatmul.bf16.gmra.mxu0 %v1009
      %v1394 = vpop.f32.mrf.mxu0
      %v1395 = vadd.f32 0.0, %v1394
      %v1396 = vpop.f32.mrf.mxu0
      %v1397 = vadd.f32 0.0, %v1396
      %1398 = vmatmul.bf16.gmra.mxu0 %v1012
      %v1399 = vpop.f32.mrf.mxu0
      %v1400 = vadd.f32 0.0, %v1399
      %v1401 = vpop.f32.mrf.mxu0
      %v1402 = vadd.f32 0.0, %v1401
      %1403 = vmatmul.bf16.gmra.mxu0 %v1015
      %v1404 = vpop.f32.mrf.mxu0
      %v1405 = vadd.f32 0.0, %v1404
      %v1406 = vpop.f32.mrf.mxu0
      %v1407 = vadd.f32 0.0, %v1406
      %1408 = vmatmul.bf16.gmra.mxu0 %v1360
      %v1409 = vpop.f32.mrf.mxu0
      %v1410 = vadd.f32 0.0, %v1409
      %v1411 = vpop.f32.mrf.mxu0
      %v1412 = vadd.f32 0.0, %v1411
      %1413 = vdwg.mxu0
      %v1414 = vadd.f32 %v1330, %v1375
      %v1415 = vadd.f32 %v1331, %v1377
      %v1416 = vadd.f32 %v1332, %v1380
      %v1417 = vadd.f32 %v1333, %v1382
      %v1418 = vadd.f32 %v1334, %v1385
      %v1419 = vadd.f32 %v1335, %v1387
      %v1420 = vadd.f32 %v1336, %v1390
      %v1421 = vadd.f32 %v1337, %v1392
      %v1422 = vadd.f32 %v1338, %v1395
      %v1423 = vadd.f32 %v1339, %v1397
      %v1424 = vadd.f32 %v1340, %v1400
      %v1425 = vadd.f32 %v1341, %v1402
      %v1426 = vadd.f32 %v1342, %v1405
      %v1427 = vadd.f32 %v1343, %v1407
      %v1428 = vadd.f32 %v1344, %v1410
      %v1429 = vadd.f32 %v1345, %v1412
      %v1432 = vrot.slane %v880, 1
      %v1433 = vrot.slane %v890, 1
      %v1434 = vsel %vm1154, %v1432, %v1433
      %s1435 = scalar_lea.vmem %s5, 5
      %v1436 = vld [vmem:[%s1435] sm:$0x1]
      %v1438 = vsel %vm992, %v1434, 0
      %v1441 = vsel %vm1017, %v1436, 0
      %1443 = vmatpush.bf16.msra.mxu0 0
      %1444 = vmatpush.bf16.msra.mxu0 0
      %1445 = vmatpush.bf16.msra.mxu0 0
      %1446 = vmatpush.bf16.msra.mxu0 0
      %1447 = vmatpush.bf16.msra.mxu0 0
      %1448 = vmatpush.bf16.msra.mxu0 0
      %1449 = vmatpush.bf16.msra.mxu0 0
      %1450 = vmatpush.bf16.msra.mxu0 %v1441
      %1451 = vmatmul.bf16.gmra.mxu0 %v1185
      %v1452 = vpop.f32.mrf.mxu0
      %v1453 = vadd.f32 0.0, %v1452
      %v1454 = vpop.f32.mrf.mxu0
      %v1455 = vadd.f32 0.0, %v1454
      %1456 = vmatmul.bf16.gmra.mxu0 %v1188
      %v1457 = vpop.f32.mrf.mxu0
      %v1458 = vadd.f32 0.0, %v1457
      %v1459 = vpop.f32.mrf.mxu0
      %v1460 = vadd.f32 0.0, %v1459
      %1461 = vmatmul.bf16.gmra.mxu0 %v1191
      %v1462 = vpop.f32.mrf.mxu0
      %v1463 = vadd.f32 0.0, %v1462
      %v1464 = vpop.f32.mrf.mxu0
      %v1465 = vadd.f32 0.0, %v1464
      %1466 = vmatmul.bf16.gmra.mxu0 %v1194
      %v1467 = vpop.f32.mrf.mxu0
      %v1468 = vadd.f32 0.0, %v1467
      %v1469 = vpop.f32.mrf.mxu0
      %v1470 = vadd.f32 0.0, %v1469
      %1471 = vmatmul.bf16.gmra.mxu0 %v1197
      %v1472 = vpop.f32.mrf.mxu0
      %v1473 = vadd.f32 0.0, %v1472
      %v1474 = vpop.f32.mrf.mxu0
      %v1475 = vadd.f32 0.0, %v1474
      %1476 = vmatmul.bf16.gmra.mxu0 %v1200
      %v1477 = vpop.f32.mrf.mxu0
      %v1478 = vadd.f32 0.0, %v1477
      %v1479 = vpop.f32.mrf.mxu0
      %v1480 = vadd.f32 0.0, %v1479
      %1481 = vmatmul.bf16.gmra.mxu0 %v1203
      %v1482 = vpop.f32.mrf.mxu0
      %v1483 = vadd.f32 0.0, %v1482
      %v1484 = vpop.f32.mrf.mxu0
      %v1485 = vadd.f32 0.0, %v1484
      %1486 = vmatmul.bf16.gmra.mxu0 %v1438
      %v1487 = vpop.f32.mrf.mxu0
      %v1488 = vadd.f32 0.0, %v1487
      %v1489 = vpop.f32.mrf.mxu0
      %v1490 = vadd.f32 0.0, %v1489
      %1491 = vdwg.mxu0
      %v1492 = vadd.f32 %v1414, %v1453
      %v1493 = vadd.f32 %v1415, %v1455
      %v1494 = vadd.f32 %v1416, %v1458
      %v1495 = vadd.f32 %v1417, %v1460
      %v1496 = vadd.f32 %v1418, %v1463
      %v1497 = vadd.f32 %v1419, %v1465
      %v1498 = vadd.f32 %v1420, %v1468
      %v1499 = vadd.f32 %v1421, %v1470
      %v1500 = vadd.f32 %v1422, %v1473
      %v1501 = vadd.f32 %v1423, %v1475
      %v1502 = vadd.f32 %v1424, %v1478
      %v1503 = vadd.f32 %v1425, %v1480
      %v1504 = vadd.f32 %v1426, %v1483
      %v1505 = vadd.f32 %v1427, %v1485
      %v1506 = vadd.f32 %v1428, %v1488
      %v1507 = vadd.f32 %v1429, %v1490
      %s1508 = scalar_lea.vmem %s5, 6
      %v1509 = vld [vmem:[%s1508] sm:$0x1]
      %v1511 = vsel %vm992, %v881, 0
      %v1514 = vsel %vm1017, %v1509, 0
      %1516 = vmatpush.bf16.msra.mxu0 0
      %1517 = vmatpush.bf16.msra.mxu0 0
      %1518 = vmatpush.bf16.msra.mxu0 0
      %1519 = vmatpush.bf16.msra.mxu0 0
      %1520 = vmatpush.bf16.msra.mxu0 0
      %1521 = vmatpush.bf16.msra.mxu0 0
      %1522 = vmatpush.bf16.msra.mxu0 0
      %1523 = vmatpush.bf16.msra.mxu0 %v1514
      %1524 = vmatmul.bf16.gmra.mxu0 %v1074
      %v1525 = vpop.f32.mrf.mxu0
      %v1526 = vadd.f32 0.0, %v1525
      %v1527 = vpop.f32.mrf.mxu0
      %v1528 = vadd.f32 0.0, %v1527
      %1529 = vmatmul.bf16.gmra.mxu0 %v1076
      %v1530 = vpop.f32.mrf.mxu0
      %v1531 = vadd.f32 0.0, %v1530
      %v1532 = vpop.f32.mrf.mxu0
      %v1533 = vadd.f32 0.0, %v1532
      %1534 = vmatmul.bf16.gmra.mxu0 %v1078
      %v1535 = vpop.f32.mrf.mxu0
      %v1536 = vadd.f32 0.0, %v1535
      %v1537 = vpop.f32.mrf.mxu0
      %v1538 = vadd.f32 0.0, %v1537
      %1539 = vmatmul.bf16.gmra.mxu0 %v1080
      %v1540 = vpop.f32.mrf.mxu0
      %v1541 = vadd.f32 0.0, %v1540
      %v1542 = vpop.f32.mrf.mxu0
      %v1543 = vadd.f32 0.0, %v1542
      %1544 = vmatmul.bf16.gmra.mxu0 %v1082
      %v1545 = vpop.f32.mrf.mxu0
      %v1546 = vadd.f32 0.0, %v1545
      %v1547 = vpop.f32.mrf.mxu0
      %v1548 = vadd.f32 0.0, %v1547
      %1549 = vmatmul.bf16.gmra.mxu0 %v1084
      %v1550 = vpop.f32.mrf.mxu0
      %v1551 = vadd.f32 0.0, %v1550
      %v1552 = vpop.f32.mrf.mxu0
      %v1553 = vadd.f32 0.0, %v1552
      %1554 = vmatmul.bf16.gmra.mxu0 %v1276
      %v1555 = vpop.f32.mrf.mxu0
      %v1556 = vadd.f32 0.0, %v1555
      %v1557 = vpop.f32.mrf.mxu0
      %v1558 = vadd.f32 0.0, %v1557
      %1559 = vmatmul.bf16.gmra.mxu0 %v1511
      %v1560 = vpop.f32.mrf.mxu0
      %v1561 = vadd.f32 0.0, %v1560
      %v1562 = vpop.f32.mrf.mxu0
      %v1563 = vadd.f32 0.0, %v1562
      %1564 = vdwg.mxu0
      %v1565 = vadd.f32 %v1492, %v1526
      %v1566 = vadd.f32 %v1493, %v1528
      %v1567 = vadd.f32 %v1494, %v1531
      %v1568 = vadd.f32 %v1495, %v1533
      %v1569 = vadd.f32 %v1496, %v1536
      %v1570 = vadd.f32 %v1497, %v1538
      %v1571 = vadd.f32 %v1498, %v1541
      %v1572 = vadd.f32 %v1499, %v1543
      %v1573 = vadd.f32 %v1500, %v1546
      %v1574 = vadd.f32 %v1501, %v1548
      %v1575 = vadd.f32 %v1502, %v1551
      %v1576 = vadd.f32 %v1503, %v1553
      %v1577 = vadd.f32 %v1504, %v1556
      %v1578 = vadd.f32 %v1505, %v1558
      %v1579 = vadd.f32 %v1506, %v1561
      %v1580 = vadd.f32 %v1507, %v1563
      %v1581 = vshrl.u32 %v881, 16
      %v1583 = vshll.u32 %v881, 16
      %v1585 = vrot.slane %v1583, 1
      %v1586 = vor.u32 %v1581, %v1585
      %v1588 = vshll.u32 %v891, 16
      %v1590 = vrot.slane %v1588, 1
      %v1591 = vsel %vm893, %v1586, %v1590
      %s1592 = scalar_lea.vmem %s5, 7
      %v1593 = vld [vmem:[%s1592] sm:$0x1]
      %v1595 = vsel %vm992, %v1591, 0
      %v1598 = vsel %vm1017, %v1593, 0
      %1600 = vmatpush.bf16.msra.mxu0 0
      %1601 = vmatpush.bf16.msra.mxu0 0
      %1602 = vmatpush.bf16.msra.mxu0 0
      %1603 = vmatpush.bf16.msra.mxu0 0
      %1604 = vmatpush.bf16.msra.mxu0 0
      %1605 = vmatpush.bf16.msra.mxu0 0
      %1606 = vmatpush.bf16.msra.mxu0 0
      %1607 = vmatpush.bf16.msra.mxu0 %v1598
      %1608 = vmatmul.bf16.gmra.mxu0 %v1000
      %v1609 = vpop.f32.mrf.mxu0
      %v1610 = vadd.f32 0.0, %v1609
      %v1611 = vpop.f32.mrf.mxu0
      %v1612 = vadd.f32 0.0, %v1611
      %1613 = vmatmul.bf16.gmra.mxu0 %v1003
      %v1614 = vpop.f32.mrf.mxu0
      %v1615 = vadd.f32 0.0, %v1614
      %v1616 = vpop.f32.mrf.mxu0
      %v1617 = vadd.f32 0.0, %v1616
      %1618 = vmatmul.bf16.gmra.mxu0 %v1006
      %v1619 = vpop.f32.mrf.mxu0
      %v1620 = vadd.f32 0.0, %v1619
      %v1621 = vpop.f32.mrf.mxu0
      %v1622 = vadd.f32 0.0, %v1621
      %1623 = vmatmul.bf16.gmra.mxu0 %v1009
      %v1624 = vpop.f32.mrf.mxu0
      %v1625 = vadd.f32 0.0, %v1624
      %v1626 = vpop.f32.mrf.mxu0
      %v1627 = vadd.f32 0.0, %v1626
      %1628 = vmatmul.bf16.gmra.mxu0 %v1012
      %v1629 = vpop.f32.mrf.mxu0
      %v1630 = vadd.f32 0.0, %v1629
      %v1631 = vpop.f32.mrf.mxu0
      %v1632 = vadd.f32 0.0, %v1631
      %1633 = vmatmul.bf16.gmra.mxu0 %v1015
      %v1634 = vpop.f32.mrf.mxu0
      %v1635 = vadd.f32 0.0, %v1634
      %v1636 = vpop.f32.mrf.mxu0
      %v1637 = vadd.f32 0.0, %v1636
      %1638 = vmatmul.bf16.gmra.mxu0 %v1360
      %v1639 = vpop.f32.mrf.mxu0
      %v1640 = vadd.f32 0.0, %v1639
      %v1641 = vpop.f32.mrf.mxu0
      %v1642 = vadd.f32 0.0, %v1641
      %1643 = vmatmul.bf16.gmra.mxu0 %v1595
      %v1644 = vpop.f32.mrf.mxu0
      %v1645 = vadd.f32 0.0, %v1644
      %v1646 = vpop.f32.mrf.mxu0
      %v1647 = vadd.f32 0.0, %v1646
      %1648 = vdwg.mxu0
      %v1649 = vadd.f32 %v1565, %v1610
      %v1650 = vadd.f32 %v1566, %v1612
      %v1651 = vadd.f32 %v1567, %v1615
      %v1652 = vadd.f32 %v1568, %v1617
      %v1653 = vadd.f32 %v1569, %v1620
      %v1654 = vadd.f32 %v1570, %v1622
      %v1655 = vadd.f32 %v1571, %v1625
      %v1656 = vadd.f32 %v1572, %v1627
      %v1657 = vadd.f32 %v1573, %v1630
      %v1658 = vadd.f32 %v1574, %v1632
      %v1659 = vadd.f32 %v1575, %v1635
      %v1660 = vadd.f32 %v1576, %v1637
      %v1661 = vadd.f32 %v1577, %v1640
      %v1662 = vadd.f32 %v1578, %v1642
      %v1663 = vadd.f32 %v1579, %v1645
      %v1664 = vadd.f32 %v1580, %v1647
      %v1667 = vrot.slane %v881, 1
      %v1668 = vrot.slane %v891, 1
      %v1669 = vsel %vm1154, %v1667, %v1668
      %s1670 = scalar_lea.vmem %s5, 8
      %v1671 = vld [vmem:[%s1670] sm:$0x1]
      %v1673 = vsel %vm992, %v1669, 0
      %v1676 = vsel %vm1017, %v1671, 0
      %1678 = vmatpush.bf16.msra.mxu0 0
      %1679 = vmatpush.bf16.msra.mxu0 0
      %1680 = vmatpush.bf16.msra.mxu0 0
      %1681 = vmatpush.bf16.msra.mxu0 0
      %1682 = vmatpush.bf16.msra.mxu0 0
      %1683 = vmatpush.bf16.msra.mxu0 0
      %1684 = vmatpush.bf16.msra.mxu0 0
      %1685 = vmatpush.bf16.msra.mxu0 %v1676
      %1686 = vmatmul.bf16.gmra.mxu0 %v1188
      %v1687 = vpop.f32.mrf.mxu0
      %v1688 = vadd.f32 0.0, %v1687
      %v1689 = vpop.f32.mrf.mxu0
      %v1690 = vadd.f32 0.0, %v1689
      %1691 = vmatmul.bf16.gmra.mxu0 %v1191
      %v1692 = vpop.f32.mrf.mxu0
      %v1693 = vadd.f32 0.0, %v1692
      %v1694 = vpop.f32.mrf.mxu0
      %v1695 = vadd.f32 0.0, %v1694
      %1696 = vmatmul.bf16.gmra.mxu0 %v1194
      %v1697 = vpop.f32.mrf.mxu0
      %v1698 = vadd.f32 0.0, %v1697
      %v1699 = vpop.f32.mrf.mxu0
      %v1700 = vadd.f32 0.0, %v1699
      %1701 = vmatmul.bf16.gmra.mxu0 %v1197
      %v1702 = vpop.f32.mrf.mxu0
      %v1703 = vadd.f32 0.0, %v1702
      %v1704 = vpop.f32.mrf.mxu0
      %v1705 = vadd.f32 0.0, %v1704
      %1706 = vmatmul.bf16.gmra.mxu0 %v1200
      %v1707 = vpop.f32.mrf.mxu0
      %v1708 = vadd.f32 0.0, %v1707
      %v1709 = vpop.f32.mrf.mxu0
      %v1710 = vadd.f32 0.0, %v1709
      %1711 = vmatmul.bf16.gmra.mxu0 %v1203
      %v1712 = vpop.f32.mrf.mxu0
      %v1713 = vadd.f32 0.0, %v1712
      %v1714 = vpop.f32.mrf.mxu0
      %v1715 = vadd.f32 0.0, %v1714
      %1716 = vmatmul.bf16.gmra.mxu0 %v1438
      %v1717 = vpop.f32.mrf.mxu0
      %v1718 = vadd.f32 0.0, %v1717
      %v1719 = vpop.f32.mrf.mxu0
      %v1720 = vadd.f32 0.0, %v1719
      %1721 = vmatmul.bf16.gmra.mxu0 %v1673
      %v1722 = vpop.f32.mrf.mxu0
      %v1723 = vadd.f32 0.0, %v1722
      %v1724 = vpop.f32.mrf.mxu0
      %v1725 = vadd.f32 0.0, %v1724
      %1726 = vdwg.mxu0
      %v1727 = vadd.f32 %v1649, %v1688
      %v1728 = vadd.f32 %v1650, %v1690
      %v1729 = vadd.f32 %v1651, %v1693
      %v1730 = vadd.f32 %v1652, %v1695
      %v1731 = vadd.f32 %v1653, %v1698
      %v1732 = vadd.f32 %v1654, %v1700
      %v1733 = vadd.f32 %v1655, %v1703
      %v1734 = vadd.f32 %v1656, %v1705
      %v1735 = vadd.f32 %v1657, %v1708
      %v1736 = vadd.f32 %v1658, %v1710
      %v1737 = vadd.f32 %v1659, %v1713
      %v1738 = vadd.f32 %v1660, %v1715
      %v1739 = vadd.f32 %v1661, %v1718
      %v1740 = vadd.f32 %v1662, %v1720
      %v1741 = vadd.f32 %v1663, %v1723
      %v1742 = vadd.f32 %v1664, %v1725
      %v1743 = vld [vmem:[%s6] sm:$0x1]
      %v1745 = vperm.slane %v1743, 0
      %v1747 = vadd.f32 %v1727, %v1745
      %v1748 = vadd.f32 %v1728, %v1745
      %v1749 = vadd.f32 %v1729, %v1745
      %v1750 = vadd.f32 %v1730, %v1745
      %v1751 = vadd.f32 %v1731, %v1745
      %v1752 = vadd.f32 %v1732, %v1745
      %v1753 = vadd.f32 %v1733, %v1745
      %v1754 = vadd.f32 %v1734, %v1745
      %v1755 = vadd.f32 %v1735, %v1745
      %v1756 = vadd.f32 %v1736, %v1745
      %v1757 = vadd.f32 %v1737, %v1745
      %v1758 = vadd.f32 %v1738, %v1745
      %v1759 = vadd.f32 %v1739, %v1745
      %v1760 = vadd.f32 %v1740, %v1745
      %v1761 = vadd.f32 %v1741, %v1745
      %v1762 = vadd.f32 %v1742, %v1745
      %v1763 = vmul.f32 %v1747, 0.1
      %v1764 = vmul.f32 %v1748, 0.1
      %v1765 = vmul.f32 %v1749, 0.1
      %v1766 = vmul.f32 %v1750, 0.1
      %v1767 = vmul.f32 %v1751, 0.1
      %v1768 = vmul.f32 %v1752, 0.1
      %v1769 = vmul.f32 %v1753, 0.1
      %v1770 = vmul.f32 %v1754, 0.1
      %v1771 = vmul.f32 %v1755, 0.1
      %v1772 = vmul.f32 %v1756, 0.1
      %v1773 = vmul.f32 %v1757, 0.1
      %v1774 = vmul.f32 %v1758, 0.1
      %v1775 = vmul.f32 %v1759, 0.1
      %v1776 = vmul.f32 %v1760, 0.1
      %v1777 = vmul.f32 %v1761, 0.1
      %v1778 = vmul.f32 %v1762, 0.1
      %v1779 = vmax.f32 %v1747, %v1763
      %v1780 = vmax.f32 %v1748, %v1764
      %v1781 = vmax.f32 %v1749, %v1765
      %v1782 = vmax.f32 %v1750, %v1766
      %v1783 = vmax.f32 %v1751, %v1767
      %v1784 = vmax.f32 %v1752, %v1768
      %v1785 = vmax.f32 %v1753, %v1769
      %v1786 = vmax.f32 %v1754, %v1770
      %v1787 = vmax.f32 %v1755, %v1771
      %v1788 = vmax.f32 %v1756, %v1772
      %v1789 = vmax.f32 %v1757, %v1773
      %v1790 = vmax.f32 %v1758, %v1774
      %v1791 = vmax.f32 %v1759, %v1775
      %v1792 = vmax.f32 %v1760, %v1776
      %v1793 = vmax.f32 %v1761, %v1777
      %v1794 = vmax.f32 %v1762, %v1778
      %v1795 = vadd.f32 %v452, %v1779
      %v1796 = vadd.f32 %v453, %v1780
      %v1797 = vadd.f32 %v454, %v1781
      %v1798 = vadd.f32 %v455, %v1782
      %v1799 = vadd.f32 %v456, %v1783
      %v1800 = vadd.f32 %v457, %v1784
      %v1801 = vadd.f32 %v458, %v1785
      %v1802 = vadd.f32 %v459, %v1786
      %v1803 = vadd.f32 %v460, %v1787
      %v1804 = vadd.f32 %v461, %v1788
      %v1805 = vadd.f32 %v462, %v1789
      %v1806 = vadd.f32 %v463, %v1790
      %v1807 = vadd.f32 %v464, %v1791
      %v1808 = vadd.f32 %v465, %v1792
      %v1809 = vadd.f32 %v466, %v1793
      %v1810 = vadd.f32 %v467, %v1794
      %1811 = vst.msk [vmem:[%s445] sm:$0xff] %vm543, %v1795
      %1812 = vst.msk [vmem:[%s445 + $0x8] sm:$0xff] %vm543, %v1796
      %1813 = vst.msk [vmem:[%s445 + $0x10] sm:$0xff] %vm543, %v1797
      %1814 = vst.msk [vmem:[%s445 + $0x18] sm:$0xff] %vm543, %v1798
      %1815 = vst.msk [vmem:[%s445 + $0x20] sm:$0xff] %vm543, %v1799
      %1816 = vst.msk [vmem:[%s445 + $0x28] sm:$0xff] %vm543, %v1800
      %1817 = vst.msk [vmem:[%s445 + $0x30] sm:$0xff] %vm543, %v1801
      %1818 = vst.msk [vmem:[%s445 + $0x38] sm:$0xff] %vm543, %v1802
      %1819 = vst.msk [vmem:[%s445 + $0x40] sm:$0xff] %vm543, %v1803
      %1820 = vst.msk [vmem:[%s445 + $0x48] sm:$0xff] %vm543, %v1804
      %1821 = vst.msk [vmem:[%s445 + $0x50] sm:$0xff] %vm543, %v1805
      %1822 = vst.msk [vmem:[%s445 + $0x58] sm:$0xff] %vm543, %v1806
      %1823 = vst.msk [vmem:[%s445 + $0x60] sm:$0xff] %vm543, %v1807
      %1824 = vst.msk [vmem:[%s445 + $0x68] sm:$0xff] %vm543, %v1808
      %1825 = vst.msk [vmem:[%s445 + $0x70] sm:$0xff] %vm543, %v1809
      %1826 = vst.msk [vmem:[%s445 + $0x78] sm:$0xff] %vm543, %v1810
      %s1827 = smul.u32 8, %s23
      %p1828 = scmp.lt.s32.totalorder %s22, 1
      %s1829 = scalar_select %p1828, %s22, 1
      %p1830 = scmp.lt.s32.totalorder %s1827, 15
      %s1831 = scalar_select %p1830, %s1827, 15
      %s1832 = smul.addr %s1831, 2
      %s1833 = smul.addr %s1829, 32
      %s1834 = sadd.s32 %s1832, %s1833
      %s1835 = smul.addr %s1834, 8
      %s1836 = scalar_lea.vmem %s7, %s1835
      // Predicated region
      $region49: #{tpu_custom_call.1} parent=47 // pred_check
        %p1837 = pneg %p234
      $region50: #{tpu_custom_call.1} parent=47 // pred_check_branch
        %1839 = sbr.rel (%p1837) target = $region52
      $region51: #{tpu_custom_call.1} parent=47 // pred_region
        %s1840 = smul.u32 8, %s23
      $region52: #{tpu_custom_call.1} parent=47 // pred_fallthru
        _
    $region48: #{tpu_custom_call.1} parent=5 // pred_fallthru
      _
    %p1841 = scmp.le.s32.totalorder 2, %s13
    // Predicated region
    $region53: #{tpu_custom_call.1} parent=5 // pred_check
      %p1842 = pneg %p1841
    $region54: #{tpu_custom_call.1} parent=5 // pred_check_branch
      %1844 = sbr.rel (%p1842) target = $region56
    $region55: #{tpu_custom_call.1} parent=5 // pred_region
      %s1845 = ssub.s32 %s13, 2
      // Predicated region
      $region57: #{tpu_custom_call.1} parent=55 // pred_check
        %p1846 = pneg %p240
      $region58: #{tpu_custom_call.1} parent=55 // pred_check_branch
        %1848 = sbr.rel (%p1846) target = $region60
      $region59: #{tpu_custom_call.1} parent=55 // pred_region
        %s1849 = smul.u32 8, %s25
        %p1850 = scmp.lt.s32.totalorder %s24, 1
        %s1851 = scalar_select %p1850, %s24, 1
        %p1852 = scmp.lt.s32.totalorder %s1849, 15
        %s1853 = scalar_select %p1852, %s1849, 15
        %s1854 = smul.addr %s1853, 2
        %s1855 = smul.addr %s1851, 32
        %s1856 = sadd.s32 %s1854, %s1855
        %s1857 = smul.addr %s1856, 8
        %s1858 = scalar_lea.vmem %s7, %s1857
      $region60: #{tpu_custom_call.1} parent=55 // pred_fallthru
        _
    $region56: #{tpu_custom_call.1} parent=5 // pred_fallthru
      _
  $region6: #{tpu_custom_call.1} parent=0 // loop_footer
    %s17 = sadd.s32 1, %s13
  $region7: #{tpu_custom_call.1} parent=0 // loop_footer_branch
    %12 = sbr.rel target = $region3
  $region8: #{tpu_custom_call.1} parent=0 // loop_exit
    _

</llo_original>
